<compile_context>
chip_gen: v7x
topology: tpu7x:2x2x1
jax: 0.10.0
libtpu: 0.0.40
codegen_flags: <defaults>
</compile_context>

<pallas_src>
import functools

import numpy as np
import jax
import jax.numpy as jnp
from jax.experimental import pallas as pl
from jax.experimental.pallas import tpu as pltpu


# ----------------------------------------------------------------------------
# Pallas kernel: conv+BN (fused matmul) -> ReLU -> conv+BN -> +skip -> ReLU
# ----------------------------------------------------------------------------
def _residual_block_kernel(K, x_ref, w1_ref, b1_ref, w2_ref, b2_ref, o_ref, xs_ref):
    tn, L, Cp = x_ref.shape
    pad = (K - 1) // 2

    def conv_bn(inp, w_ref, b_ref):
        # Assemble the shifted tap stack [x[t-pad] | ... | x[t+pad]] in VMEM
        # scratch.  Lane offsets are multiples of Cp (128-aligned); the time
        # shifts are static sublane-offset stores (zero rows at the borders
        # reproduce Conv1d's zero "same" padding).
        for k in range(K):
            off = k - pad
            lo, hi = k * Cp, (k + 1) * Cp
            if off == 0:
                xs_ref[:, :, lo:hi] = inp
            elif off < 0:
                s = -off
                xs_ref[:, 0:s, lo:hi] = jnp.zeros((tn, s, Cp), jnp.float32)
                xs_ref[:, s:, lo:hi] = inp[:, : L - s, :]
            else:
                s = off
                xs_ref[:, : L - s, lo:hi] = inp[:, s:, :]
                xs_ref[:, L - s :, lo:hi] = jnp.zeros((tn, s, Cp), jnp.float32)

        # One wide MXU matmul per conv layer: (tn*L, K*Cp) @ (K*Cp, Cp),
        # bf16 operands, f32 accumulation.  BN scale is folded into the weight,
        # BN shift (+ conv bias) into the f32 bias vector.
        xs = xs_ref[...].reshape(tn * L, K * Cp).astype(jnp.bfloat16)
        y = jnp.dot(xs, w_ref[...], preferred_element_type=jnp.float32)
        return (y + b_ref[...]).reshape(tn, L, Cp)

    x = x_ref[...]                                       # (tn, L, Cp) f32
    h = jnp.maximum(conv_bn(x, w1_ref, b1_ref), 0.0)     # ReLU(BN1(conv1(x)))
    y = conv_bn(h, w2_ref, b2_ref) + x                   # BN2(conv2(h)) + skip
    o_ref[...] = jnp.maximum(y, 0.0).astype(o_ref.dtype)


# ----------------------------------------------------------------------------
# Host-side packing: fold BN (eval mode) into the conv, pad channels, reorder
# the (Cout, Cin, K) PyTorch weight into a single (K*Cp, Cp) matmul weight.
# ----------------------------------------------------------------------------
def _fold_conv_bn(w, b, gamma, beta, mean, var, C, Cp, eps):
    scale = gamma / jnp.sqrt(var + eps)                  # (C,)
    w_eff = w * scale[:, None, None]                     # (Cout, Cin, K)
    b_eff = (b - mean) * scale + beta                    # (C,)
    K = w.shape[2]
    wkic = jnp.transpose(w_eff, (2, 1, 0))               # (K, Cin, Cout)
    wkic = jnp.pad(wkic, ((0, 0), (0, Cp - C), (0, Cp - C)))
    wcat = wkic.reshape(K * Cp, Cp).astype(jnp.bfloat16)  # bf16 MXU weights
    bvec = jnp.pad(b_eff, (0, Cp - C)).reshape(1, Cp).astype(jnp.float32)
    return wcat, bvec


# ----------------------------------------------------------------------------
# Wrapper: PyTorch-layout (N, C, L) in / out
# ----------------------------------------------------------------------------
def residual_block(x, w1, b1, gamma1, beta1, mean1, var1,
                   w2, b2, gamma2, beta2, mean2, var2, *, eps=1e-5):
    N, C, L = x.shape
    K = w1.shape[2]
    assert L >= (K - 1) // 2 + 1, "sequence too short for the conv kernel"

    Cp = ((C + 127) // 128) * 128                        # lane-dense channels

    wc1, bv1 = _fold_conv_bn(w1, b1, gamma1, beta1, mean1, var1, C, Cp, eps)
    wc2, bv2 = _fold_conv_bn(w2, b2, gamma2, beta2, mean2, var2, C, Cp, eps)

    # (N, C, L) -> (N, L, Cp): channels on lanes.
    xt = jnp.transpose(x, (0, 2, 1)).astype(jnp.float32)
    if Cp != C:
        xt = jnp.pad(xt, ((0, 0), (0, 0), (0, Cp - C)))

    # Batch tiling: full time axis per step (no halos); ~2 MiB activation block
    # per step; keep >= 2 grid steps when possible so v7x's 2 TCs both work.
    rows_target = max(8, (2 * 1024 * 1024) // (Cp * 4))
    tile_n = max(1, min(N, rows_target // max(L, 1)))
    if N >= 2:
        tile_n = min(tile_n, (N + 1) // 2)
    grid_n = (N + tile_n - 1) // tile_n
    N_pad = grid_n * tile_n
    if N_pad != N:
        xt = jnp.pad(xt, ((0, N_pad - N), (0, 0), (0, 0)))

    # Explicit VMEM budget (double-buffered in/out blocks + scratch + filters
    # + headroom for in-kernel temporaries); well under v7x's 64 MiB.
    block_bytes = tile_n * L * Cp * 4
    scratch_bytes = tile_n * L * K * Cp * 4
    filt_bytes = 2 * (K * Cp * Cp * 2 + Cp * 4)
    vmem_limit = min(max(4 * block_bytes + scratch_bytes + 2 * filt_bytes
                         + (8 << 20), 32 << 20), 48 << 20)

    flops = 2 * (2 * N_pad * L * (K * Cp) * Cp)          # two conv matmuls
    bytes_accessed = 2 * N_pad * L * Cp * 4 + 2 * K * Cp * Cp * 2 + 2 * Cp * 4

    kernel = functools.partial(_residual_block_kernel, K)
    out = pl.pallas_call(
        kernel,
        out_shape=jax.ShapeDtypeStruct((N_pad, L, Cp), jnp.float32),
        grid_spec=pltpu.PrefetchScalarGridSpec(
            num_scalar_prefetch=0,
            grid=(grid_n,),
            in_specs=[
                pl.BlockSpec((tile_n, L, Cp), lambda i: (i, 0, 0)),
                pl.BlockSpec((K * Cp, Cp), lambda i: (0, 0)),
                pl.BlockSpec((1, Cp), lambda i: (0, 0)),
                pl.BlockSpec((K * Cp, Cp), lambda i: (0, 0)),
                pl.BlockSpec((1, Cp), lambda i: (0, 0)),
            ],
            out_specs=pl.BlockSpec((tile_n, L, Cp), lambda i: (i, 0, 0)),
            scratch_shapes=[pltpu.VMEM((tile_n, L, K * Cp), jnp.float32)],
        ),
        compiler_params=pltpu.CompilerParams(
            dimension_semantics=("parallel",),
            vmem_limit_bytes=vmem_limit,
        ),
        cost_estimate=pl.CostEstimate(
            flops=flops, transcendentals=0, bytes_accessed=bytes_accessed),
    )(xt, wc1, bv1, wc2, bv2)

    out = out[:N, :, :C]
    return jnp.transpose(out, (0, 2, 1))                 # back to (N, C, L)


# ----------------------------------------------------------------------------
# Pure-JAX f32 reference of the same forward pass (eval-mode BN)
# ----------------------------------------------------------------------------
def _ref_forward(x, w1, b1, g1, be1, m1, v1, w2, b2, g2, be2, m2, v2, eps=1e-5):
    def conv1d_same(inp, w, b):
        n, c, l = inp.shape
        xp = jnp.pad(inp, ((0, 0), (0, 0), (1, 1)))
        y = jnp.zeros((n, w.shape[0], l), jnp.float32)
        for k in range(w.shape[2]):
            y = y + jnp.einsum('oi,nil->nol', w[:, :, k], xp[:, :, k:k + l])
        return y + b[None, :, None]

    def bn(inp, g, be, m, v):
        return (g[None, :, None] * (inp - m[None, :, None])
                / jnp.sqrt(v[None, :, None] + eps) + be[None, :, None])

    h = jax.nn.relu(bn(conv1d_same(x, w1, b1), g1, be1, m1, v1))
    y = bn(conv1d_same(h, w2, b2), g2, be2, m2, v2) + x
    return jax.nn.relu(y)


if __name__ == "__main__":
    N, C, L, K = 2, 128, 256, 3

    key = jax.random.PRNGKey(0)
    ks = jax.random.split(key, 13)
    x = jax.random.normal(ks[0], (N, C, L), jnp.float32)

    fan_in = C * K
    w1 = jax.random.normal(ks[1], (C, C, K), jnp.float32) / np.sqrt(fan_in)
    b1 = 0.1 * jax.random.normal(ks[2], (C,), jnp.float32)
    w2 = jax.random.normal(ks[3], (C, C, K), jnp.float32) / np.sqrt(fan_in)
    b2 = 0.1 * jax.random.normal(ks[4], (C,), jnp.float32)

    g1 = 1.0 + 0.1 * jax.random.normal(ks[5], (C,), jnp.float32)
    be1 = 0.1 * jax.random.normal(ks[6], (C,), jnp.float32)
    m1 = 0.1 * jax.random.normal(ks[7], (C,), jnp.float32)
    v1 = jax.random.uniform(ks[8], (C,), jnp.float32, 0.5, 1.5)
    g2 = 1.0 + 0.1 * jax.random.normal(ks[9], (C,), jnp.float32)
    be2 = 0.1 * jax.random.normal(ks[10], (C,), jnp.float32)
    m2 = 0.1 * jax.random.normal(ks[11], (C,), jnp.float32)
    v2 = jax.random.uniform(ks[12], (C,), jnp.float32, 0.5, 1.5)

    out = residual_block(x, w1, b1, g1, be1, m1, v1, w2, b2, g2, be2, m2, v2)
    out = jax.block_until_ready(out)
    assert out.shape == (N, C, L), out.shape

    ref = _ref_forward(x, w1, b1, g1, be1, m1, v1, w2, b2, g2, be2, m2, v2)
    # bf16 MXU operands with f32 accumulation -> loosened tolerance vs f32 ref.
    np.testing.assert_allclose(np.asarray(out), np.asarray(ref),
                               rtol=5e-2, atol=5e-2)

    print("KERNEL_OK")
</pallas_src>

<mosaic_0001>
module attributes {stable_mosaic.version = 11 : i64} {
  func.func @_residual_block_kernel(%arg0: i32, %arg1: memref<1x256x128xf32, #tpu.memory_space<vmem>>, %arg2: memref<384x128xbf16, #tpu.memory_space<vmem>>, %arg3: memref<1x128xf32, #tpu.memory_space<vmem>>, %arg4: memref<384x128xbf16, #tpu.memory_space<vmem>>, %arg5: memref<1x128xf32, #tpu.memory_space<vmem>>, %arg6: memref<1x256x128xf32, #tpu.memory_space<vmem>>, %arg7: memref<1x256x384xf32, #tpu.memory_space<vmem>>) attributes {dimension_semantics = [#tpu.dimension_semantics<parallel>], iteration_bounds = array<i64: 2>, scalar_prefetch = 0 : i64, scratch_operands = 1 : i64, tpu.core_type = #tpu.core_type<tc>, window_params = [{transform_indices = @transform_0, window_bounds = array<i64: 1, 256, 128>}, {pipeline_mode = #tpu.pipeline_mode<synchronous>, transform_indices = @transform_1, window_bounds = array<i64: 384, 128>}, {pipeline_mode = #tpu.pipeline_mode<synchronous>, transform_indices = @transform_2, window_bounds = array<i64: 1, 128>}, {pipeline_mode = #tpu.pipeline_mode<synchronous>, transform_indices = @transform_3, window_bounds = array<i64: 384, 128>}, {pipeline_mode = #tpu.pipeline_mode<synchronous>, transform_indices = @transform_4, window_bounds = array<i64: 1, 128>}, {transform_indices = @transform_5, window_bounds = array<i64: 1, 256, 128>}]} {
    %c0 = arith.constant 0 : index
    %c0_0 = arith.constant 0 : index
    %c0_1 = arith.constant 0 : index
    %0 = vector.load %arg1[%c0, %c0_0, %c0_1] : memref<1x256x128xf32, #tpu.memory_space<vmem>>, vector<1x256x128xf32>
    %cst = arith.constant 0.000000e+00 : f32
    %1 = vector.broadcast %cst : f32 to vector<1x1x128xf32>
    %c0_2 = arith.constant 0 : index
    %c0_3 = arith.constant 0 : index
    %c0_4 = arith.constant 0 : index
    %2 = vector.load %arg7[%c0_2, %c0_3, %c0_4] : memref<1x256x384xf32, #tpu.memory_space<vmem>>, vector<1x1x128xf32>
    tpu.vector_store %arg7[%c0_2, %c0_3, %c0_4], %1 {strides = array<i32>} : memref<1x256x384xf32, #tpu.memory_space<vmem>>, vector<1x1x128xf32>,
    %3 = vector.extract_strided_slice %0 {offsets = [0, 0, 0], sizes = [1, 255, 128], strides = [1, 1, 1]} : vector<1x256x128xf32> to vector<1x255x128xf32>
    %c0_5 = arith.constant 0 : index
    %c1 = arith.constant 1 : index
    %c0_6 = arith.constant 0 : index
    %4 = vector.load %arg7[%c0_5, %c1, %c0_6] : memref<1x256x384xf32, #tpu.memory_space<vmem>>, vector<1x255x128xf32>
    tpu.vector_store %arg7[%c0_5, %c1, %c0_6], %3 {strides = array<i32>} : memref<1x256x384xf32, #tpu.memory_space<vmem>>, vector<1x255x128xf32>,
    %c0_7 = arith.constant 0 : index
    %c0_8 = arith.constant 0 : index
    %c128 = arith.constant 128 : index
    %5 = vector.load %arg7[%c0_7, %c0_8, %c128] : memref<1x256x384xf32, #tpu.memory_space<vmem>>, vector<1x256x128xf32>
    tpu.vector_store %arg7[%c0_7, %c0_8, %c128], %0 {strides = array<i32>} : memref<1x256x384xf32, #tpu.memory_space<vmem>>, vector<1x256x128xf32>,
    %6 = vector.extract_strided_slice %0 {offsets = [0, 1, 0], sizes = [1, 255, 128], strides = [1, 1, 1]} : vector<1x256x128xf32> to vector<1x255x128xf32>
    %c0_9 = arith.constant 0 : index
    %c0_10 = arith.constant 0 : index
    %c256 = arith.constant 256 : index
    %7 = vector.load %arg7[%c0_9, %c0_10, %c256] : memref<1x256x384xf32, #tpu.memory_space<vmem>>, vector<1x255x128xf32>
    tpu.vector_store %arg7[%c0_9, %c0_10, %c256], %6 {strides = array<i32>} : memref<1x256x384xf32, #tpu.memory_space<vmem>>, vector<1x255x128xf32>,
    %cst_11 = arith.constant 0.000000e+00 : f32
    %8 = vector.broadcast %cst_11 : f32 to vector<1x1x128xf32>
    %c0_12 = arith.constant 0 : index
    %c255 = arith.constant 255 : index
    %c256_13 = arith.constant 256 : index
    %9 = vector.load %arg7[%c0_12, %c255, %c256_13] : memref<1x256x384xf32, #tpu.memory_space<vmem>>, vector<1x1x128xf32>
    tpu.vector_store %arg7[%c0_12, %c255, %c256_13], %8 {strides = array<i32>} : memref<1x256x384xf32, #tpu.memory_space<vmem>>, vector<1x1x128xf32>,
    %c0_14 = arith.constant 0 : index
    %c0_15 = arith.constant 0 : index
    %c0_16 = arith.constant 0 : index
    %10 = vector.load %arg7[%c0_14, %c0_15, %c0_16] : memref<1x256x384xf32, #tpu.memory_space<vmem>>, vector<1x256x384xf32>
    %11 = vector.shape_cast %10 : vector<1x256x384xf32> to vector<256x384xf32>
    %12 = arith.truncf %11 : vector<256x384xf32> to vector<256x384xbf16>
    %c0_17 = arith.constant 0 : index
    %c0_18 = arith.constant 0 : index
    %13 = vector.load %arg2[%c0_17, %c0_18] : memref<384x128xbf16, #tpu.memory_space<vmem>>, vector<384x128xbf16>
    %cst_19 = arith.constant dense<0.000000e+00> : vector<256x128xf32>
    %14 = tpu.matmul %12, %13, %cst_19 {dimension_numbers = #tpu.dot_dimension_numbers<[1], [0], [0], [1], [0, 0, 1, 1], [], []>} : vector<256x384xbf16>, vector<384x128xbf16>, vector<256x128xf32> -> vector<256x128xf32>
    %c0_20 = arith.constant 0 : index
    %c0_21 = arith.constant 0 : index
    %15 = vector.load %arg3[%c0_20, %c0_21] : memref<1x128xf32, #tpu.memory_space<vmem>>, vector<1x128xf32>
    %16 = vector.broadcast %15 : vector<1x128xf32> to vector<256x128xf32>
    %17 = arith.addf %14, %16 : vector<256x128xf32>
    %18 = vector.shape_cast %17 : vector<256x128xf32> to vector<1x256x128xf32>
    %cst_22 = arith.constant 0.000000e+00 : f32
    %19 = vector.broadcast %cst_22 : f32 to vector<1x256x128xf32>
    %20 = arith.maximumf %18, %19 : vector<1x256x128xf32>
    %cst_23 = arith.constant 0.000000e+00 : f32
    %21 = vector.broadcast %cst_23 : f32 to vector<1x1x128xf32>
    %c0_24 = arith.constant 0 : index
    %c0_25 = arith.constant 0 : index
    %c0_26 = arith.constant 0 : index
    %22 = vector.load %arg7[%c0_24, %c0_25, %c0_26] : memref<1x256x384xf32, #tpu.memory_space<vmem>>, vector<1x1x128xf32>
    tpu.vector_store %arg7[%c0_24, %c0_25, %c0_26], %21 {strides = array<i32>} : memref<1x256x384xf32, #tpu.memory_space<vmem>>, vector<1x1x128xf32>,
    %23 = vector.extract_strided_slice %20 {offsets = [0, 0, 0], sizes = [1, 255, 128], strides = [1, 1, 1]} : vector<1x256x128xf32> to vector<1x255x128xf32>
    %c0_27 = arith.constant 0 : index
    %c1_28 = arith.constant 1 : index
    %c0_29 = arith.constant 0 : index
    %24 = vector.load %arg7[%c0_27, %c1_28, %c0_29] : memref<1x256x384xf32, #tpu.memory_space<vmem>>, vector<1x255x128xf32>
    tpu.vector_store %arg7[%c0_27, %c1_28, %c0_29], %23 {strides = array<i32>} : memref<1x256x384xf32, #tpu.memory_space<vmem>>, vector<1x255x128xf32>,
    %c0_30 = arith.constant 0 : index
    %c0_31 = arith.constant 0 : index
    %c128_32 = arith.constant 128 : index
    %25 = vector.load %arg7[%c0_30, %c0_31, %c128_32] : memref<1x256x384xf32, #tpu.memory_space<vmem>>, vector<1x256x128xf32>
    tpu.vector_store %arg7[%c0_30, %c0_31, %c128_32], %20 {strides = array<i32>} : memref<1x256x384xf32, #tpu.memory_space<vmem>>, vector<1x256x128xf32>,
    %26 = vector.extract_strided_slice %20 {offsets = [0, 1, 0], sizes = [1, 255, 128], strides = [1, 1, 1]} : vector<1x256x128xf32> to vector<1x255x128xf32>
    %c0_33 = arith.constant 0 : index
    %c0_34 = arith.constant 0 : index
    %c256_35 = arith.constant 256 : index
    %27 = vector.load %arg7[%c0_33, %c0_34, %c256_35] : memref<1x256x384xf32, #tpu.memory_space<vmem>>, vector<1x255x128xf32>
    tpu.vector_store %arg7[%c0_33, %c0_34, %c256_35], %26 {strides = array<i32>} : memref<1x256x384xf32, #tpu.memory_space<vmem>>, vector<1x255x128xf32>,
    %cst_36 = arith.constant 0.000000e+00 : f32
    %28 = vector.broadcast %cst_36 : f32 to vector<1x1x128xf32>
    %c0_37 = arith.constant 0 : index
    %c255_38 = arith.constant 255 : index
    %c256_39 = arith.constant 256 : index
    %29 = vector.load %arg7[%c0_37, %c255_38, %c256_39] : memref<1x256x384xf32, #tpu.memory_space<vmem>>, vector<1x1x128xf32>
    tpu.vector_store %arg7[%c0_37, %c255_38, %c256_39], %28 {strides = array<i32>} : memref<1x256x384xf32, #tpu.memory_space<vmem>>, vector<1x1x128xf32>,
    %c0_40 = arith.constant 0 : index
    %c0_41 = arith.constant 0 : index
    %c0_42 = arith.constant 0 : index
    %30 = vector.load %arg7[%c0_40, %c0_41, %c0_42] : memref<1x256x384xf32, #tpu.memory_space<vmem>>, vector<1x256x384xf32>
    %31 = vector.shape_cast %30 : vector<1x256x384xf32> to vector<256x384xf32>
    %32 = arith.truncf %31 : vector<256x384xf32> to vector<256x384xbf16>
    %c0_43 = arith.constant 0 : index
    %c0_44 = arith.constant 0 : index
    %33 = vector.load %arg4[%c0_43, %c0_44] : memref<384x128xbf16, #tpu.memory_space<vmem>>, vector<384x128xbf16>
    %cst_45 = arith.constant dense<0.000000e+00> : vector<256x128xf32>
    %34 = tpu.matmul %32, %33, %cst_45 {dimension_numbers = #tpu.dot_dimension_numbers<[1], [0], [0], [1], [0, 0, 1, 1], [], []>} : vector<256x384xbf16>, vector<384x128xbf16>, vector<256x128xf32> -> vector<256x128xf32>
    %c0_46 = arith.constant 0 : index
    %c0_47 = arith.constant 0 : index
    %35 = vector.load %arg5[%c0_46, %c0_47] : memref<1x128xf32, #tpu.memory_space<vmem>>, vector<1x128xf32>
    %36 = vector.broadcast %35 : vector<1x128xf32> to vector<256x128xf32>
    %37 = arith.addf %34, %36 : vector<256x128xf32>
    %38 = vector.shape_cast %37 : vector<256x128xf32> to vector<1x256x128xf32>
    %39 = arith.addf %38, %0 : vector<1x256x128xf32>
    %cst_48 = arith.constant 0.000000e+00 : f32
    %40 = vector.broadcast %cst_48 : f32 to vector<1x256x128xf32>
    %41 = arith.maximumf %39, %40 : vector<1x256x128xf32>
    %c0_49 = arith.constant 0 : index
    %c0_50 = arith.constant 0 : index
    %c0_51 = arith.constant 0 : index
    %42 = vector.load %arg6[%c0_49, %c0_50, %c0_51] : memref<1x256x128xf32, #tpu.memory_space<vmem>>, vector<1x256x128xf32>
    tpu.vector_store %arg6[%c0_49, %c0_50, %c0_51], %41 {strides = array<i32>} : memref<1x256x128xf32, #tpu.memory_space<vmem>>, vector<1x256x128xf32>,
    return
  }
  func.func @transform_0(%arg0: i32) -> (i32, i32, i32) {
    %c0_i32 = arith.constant 0 : i32
    %c0_i32_0 = arith.constant 0 : i32
    %c0_i32_1 = arith.constant 0 : i32
    return %arg0, %c0_i32, %c0_i32_0 : i32, i32, i32
  }
  func.func @transform_1(%arg0: i32) -> (i32, i32) {
    %c0_i32 = arith.constant 0 : i32
    %c0_i32_0 = arith.constant 0 : i32
    %c0_i32_1 = arith.constant 0 : i32
    return %c0_i32, %c0_i32_0 : i32, i32
  }
  func.func @transform_2(%arg0: i32) -> (i32, i32) {
    %c0_i32 = arith.constant 0 : i32
    %c0_i32_0 = arith.constant 0 : i32
    %c0_i32_1 = arith.constant 0 : i32
    return %c0_i32, %c0_i32_0 : i32, i32
  }
  func.func @transform_3(%arg0: i32) -> (i32, i32) {
    %c0_i32 = arith.constant 0 : i32
    %c0_i32_0 = arith.constant 0 : i32
    %c0_i32_1 = arith.constant 0 : i32
    return %c0_i32, %c0_i32_0 : i32, i32
  }
  func.func @transform_4(%arg0: i32) -> (i32, i32) {
    %c0_i32 = arith.constant 0 : i32
    %c0_i32_0 = arith.constant 0 : i32
    %c0_i32_1 = arith.constant 0 : i32
    return %c0_i32, %c0_i32_0 : i32, i32
  }
  func.func @transform_5(%arg0: i32) -> (i32, i32, i32) {
    %c0_i32 = arith.constant 0 : i32
    %c0_i32_0 = arith.constant 0 : i32
    %c0_i32_1 = arith.constant 0 : i32
    return %arg0, %c0_i32, %c0_i32_0 : i32, i32, i32
  }
}

</mosaic_0001>

<llo_original>
// kernel: tpu_custom_call.1
$region0: #{tpu_custom_call.1}
  #allocation0 [shape = 'u32[]', space=smem, size = 0x4, offset = 0x4, fixed_abs, tag = 'smem constant byte address 0x4 - core index']
  #allocation1 [shape = 'u32[144,128]{1,0:T(1,128)}', space=vmem, size = 0x12000, scoped, tag = 'internal scratch']
  #allocation2 [shape = 'f32[1,256,384]{2,1,0:T(8,128)}', space=vmem, size = 0x60000, scoped, tag = 'scratch operand']
  %s0 = inlined_call_operand.hbm [shape: f32[2,256,128], index: 0, kind: input, shape index: {}]
  %s1 = inlined_call_operand.hbm [shape: bf16[384,128], index: 1, kind: input, shape index: {}]
  %s2 = inlined_call_operand.vmem [shape: f32[1,128], index: 2, kind: input, shape index: {}]
  %s3 = inlined_call_operand.hbm [shape: bf16[384,128], index: 3, kind: input, shape index: {}]
  %s4 = inlined_call_operand.vmem [shape: f32[1,128], index: 4, kind: input, shape index: {}]
  %s5 = inlined_call_operand.hbm [shape: f32[2,256,128], index: 5, kind: output, shape index: {}]
  %s6 = sld [smem:[#allocation0]]
  $region65: #{tpu_custom_call.1} parent=0
    _
  %s8 = ssub.s32 1, %s6
  %s9 = scalar_select 0, %s8, %s6
  $region1: #{tpu_custom_call.1} parent=0
    #allocation3 [shape = 'u8[262144]{0}', space=vmem, size = 0x40000, scoped, tag = 'input window, operand 0']
    #allocation4 [shape = 's32[2]{0}', space=sflag, size = 0x8, scoped, tag = 'scoped memory for tpu_custom_call.1']
    #allocation5 [shape = 's32[2]{0}', space=sflag, size = 0x8, scoped, tag = 'scoped memory for tpu_custom_call.1']
    #allocation6 [shape = 'u8[98304]{0}', space=vmem, size = 0x18000, scoped, tag = 'input window, operand 1, single buffered']
    #allocation7 [shape = 's32[1]{0}', space=sflag, size = 0x4, scoped, tag = 'scoped memory for tpu_custom_call.1']
    #allocation8 [shape = 'u8[98304]{0}', space=vmem, size = 0x18000, scoped, tag = 'input window, operand 3, single buffered']
    #allocation9 [shape = 'u8[262144]{0}', space=vmem, size = 0x40000, scoped, tag = 'output window, operand 0']
    %10 = vsyncpa [#allocation4], 0
    %s11 = scalar_lea.sflag [#allocation4], 1
    %12 = vsyncpa %s11, 0
    %13 = vsyncpa [#allocation7], 0
    %14 = vsyncpa [#allocation5], 0
    %s15 = scalar_lea.sflag [#allocation5], 1
    %16 = vsyncpa %s15, 0
    loop: start=0, step=1, limit=4
    $region2: #{tpu_custom_call.1} parent=1 // loop_pre_header
      _
    $region3: #{tpu_custom_call.1} parent=1 // loop_header
      %s18 = sphi 0, %s22
      %p19 = scmp.ge.s32.totalorder %s18, 4
      %s28 = sphi 0, %s30
      %s31 = sphi 0, %s28
      %s32 = sphi 0, %s31
      %s48 = sphi 0, %s32
      %s52 = sphi 0, %s52
      %s54 = sphi 0, %s52
      %s55 = sphi 0, %s54
      %s69 = sphi 0, %s55
      %s73 = sphi 0, %s73
      %s75 = sphi 0, %s73
      %s76 = sphi 0, %s75
      %s90 = sphi 0, %s76
      %s94 = sphi 0, %s94
      %s96 = sphi 0, %s94
      %s97 = sphi 0, %s96
      %s111 = sphi 0, %s97
      %s115 = sphi 0, %s115
      %s117 = sphi 0, %s115
      %s118 = sphi 0, %s117
      %s132 = sphi 0, %s118
      %s138 = sphi 0, %s140
      %s141 = sphi 0, %s138
      %s142 = sphi 0, %s141
      %s158 = sphi 0, %s142
    $region4: #{tpu_custom_call.1} parent=1 // loop_header_branch
      %21 = sbr.rel (%p19) target = $region8
    $region5: #{tpu_custom_call.1} parent=1 // loop_body
      %s23 = ssub.s32 %s18, 1
      %s24 = ssub.s32 %s18, 2
      %s25 = sadd.s32 %s18, 1
      %s26 = ssub.s32 %s18, %s25
      %p27 = scmp.eq.s32.totalorder %s26, 0
      %s29 = sadd.s32 %s28, 1
      %s30 = scalar_select %p27, %s28, %s29
      %p33 = pneg %p27
      %p34 = scmp.eq.s32.totalorder %s18, 1
      %p35 = por %p33, %p34
      %p36 = scmp.ne.s32.totalorder %s28, %s31
      %p37 = scmp.eq.s32.totalorder %s18, 0
      %p38 = por %p36, %p37
      %p39 = scmp.ne.s32.totalorder %s28, %s31
      %p40 = scmp.eq.s32.totalorder %s23, 1
      %p41 = por %p39, %p40
      %p42 = scmp.ne.s32.totalorder %s31, %s32
      %p43 = scmp.eq.s32.totalorder %s23, 0
      %p44 = por %p42, %p43
      %p45 = scmp.ne.s32.totalorder %s31, %s32
      %p46 = scmp.eq.s32.totalorder %s24, 1
      %p47 = por %p45, %p46
      %p49 = scmp.ne.s32.totalorder %s32, %s48
      %p50 = scmp.eq.s32.totalorder %s24, 0
      %p51 = por %p49, %p50
      %s53 = sadd.s32 %s52, 1
      %p56 = scmp.eq.s32.totalorder %s18, 1
      %p57 = scmp.ne.s32.totalorder %s52, %s54
      %p58 = scmp.eq.s32.totalorder %s18, 0
      %p59 = por %p57, %p58
      %p60 = scmp.ne.s32.totalorder %s52, %s54
      %p61 = scmp.eq.s32.totalorder %s23, 1
      %p62 = por %p60, %p61
      %p63 = scmp.ne.s32.totalorder %s54, %s55
      %p64 = scmp.eq.s32.totalorder %s23, 0
      %p65 = por %p63, %p64
      %p66 = scmp.ne.s32.totalorder %s54, %s55
      %p67 = scmp.eq.s32.totalorder %s24, 1
      %p68 = por %p66, %p67
      %p70 = scmp.ne.s32.totalorder %s55, %s69
      %p71 = scmp.eq.s32.totalorder %s24, 0
      %p72 = por %p70, %p71
      %s74 = sadd.s32 %s73, 1
      %p77 = scmp.eq.s32.totalorder %s18, 1
      %p78 = scmp.ne.s32.totalorder %s73, %s75
      %p79 = scmp.eq.s32.totalorder %s18, 0
      %p80 = por %p78, %p79
      %p81 = scmp.ne.s32.totalorder %s73, %s75
      %p82 = scmp.eq.s32.totalorder %s23, 1
      %p83 = por %p81, %p82
      %p84 = scmp.ne.s32.totalorder %s75, %s76
      %p85 = scmp.eq.s32.totalorder %s23, 0
      %p86 = por %p84, %p85
      %p87 = scmp.ne.s32.totalorder %s75, %s76
      %p88 = scmp.eq.s32.totalorder %s24, 1
      %p89 = por %p87, %p88
      %p91 = scmp.ne.s32.totalorder %s76, %s90
      %p92 = scmp.eq.s32.totalorder %s24, 0
      %p93 = por %p91, %p92
      %s95 = sadd.s32 %s94, 1
      %p98 = scmp.eq.s32.totalorder %s18, 1
      %p99 = scmp.ne.s32.totalorder %s94, %s96
      %p100 = scmp.eq.s32.totalorder %s18, 0
      %p101 = por %p99, %p100
      %p102 = scmp.ne.s32.totalorder %s94, %s96
      %p103 = scmp.eq.s32.totalorder %s23, 1
      %p104 = por %p102, %p103
      %p105 = scmp.ne.s32.totalorder %s96, %s97
      %p106 = scmp.eq.s32.totalorder %s23, 0
      %p107 = por %p105, %p106
      %p108 = scmp.ne.s32.totalorder %s96, %s97
      %p109 = scmp.eq.s32.totalorder %s24, 1
      %p110 = por %p108, %p109
      %p112 = scmp.ne.s32.totalorder %s97, %s111
      %p113 = scmp.eq.s32.totalorder %s24, 0
      %p114 = por %p112, %p113
      %s116 = sadd.s32 %s115, 1
      %p119 = scmp.eq.s32.totalorder %s18, 1
      %p120 = scmp.ne.s32.totalorder %s115, %s117
      %p121 = scmp.eq.s32.totalorder %s18, 0
      %p122 = por %p120, %p121
      %p123 = scmp.ne.s32.totalorder %s115, %s117
      %p124 = scmp.eq.s32.totalorder %s23, 1
      %p125 = por %p123, %p124
      %p126 = scmp.ne.s32.totalorder %s117, %s118
      %p127 = scmp.eq.s32.totalorder %s23, 0
      %p128 = por %p126, %p127
      %p129 = scmp.ne.s32.totalorder %s117, %s118
      %p130 = scmp.eq.s32.totalorder %s24, 1
      %p131 = por %p129, %p130
      %p133 = scmp.ne.s32.totalorder %s118, %s132
      %p134 = scmp.eq.s32.totalorder %s24, 0
      %p135 = por %p133, %p134
      %s136 = ssub.s32 %s18, %s25
      %p137 = scmp.eq.s32.totalorder %s136, 0
      %s139 = sadd.s32 %s138, 1
      %s140 = scalar_select %p137, %s138, %s139
      %p143 = pneg %p137
      %p144 = scmp.eq.s32.totalorder %s18, 1
      %p145 = por %p143, %p144
      %p146 = scmp.ne.s32.totalorder %s138, %s141
      %p147 = scmp.eq.s32.totalorder %s18, 0
      %p148 = por %p146, %p147
      %p149 = scmp.ne.s32.totalorder %s138, %s141
      %p150 = scmp.eq.s32.totalorder %s23, 1
      %p151 = por %p149, %p150
      %p152 = scmp.ne.s32.totalorder %s141, %s142
      %p153 = scmp.eq.s32.totalorder %s23, 0
      %p154 = por %p152, %p153
      %p155 = scmp.ne.s32.totalorder %s141, %s142
      %p156 = scmp.eq.s32.totalorder %s24, 1
      %p157 = por %p155, %p156
      %p159 = scmp.ne.s32.totalorder %s142, %s158
      %p160 = scmp.eq.s32.totalorder %s24, 0
      %p161 = por %p159, %p160
      %p162 = scmp.le.s32.totalorder 1, %s18
      %p163 = scmp.lt.s32.totalorder %s18, 3
      %p164 = pnand %p162, %p163
      %p165 = pneg %p164
      // Predicated region
      $region9: #{tpu_custom_call.1} parent=5 // pred_check
        _
      $region10: #{tpu_custom_call.1} parent=5 // pred_check_branch
        %167 = sbr.rel (%p164) target = $region12
      $region11: #{tpu_custom_call.1} parent=5 // pred_region
        %s168 = ssub.s32 %s18, 1
        // Predicated region
        $region13: #{tpu_custom_call.1} parent=11 // pred_check
          %p169 = pneg %p65
        $region14: #{tpu_custom_call.1} parent=11 // pred_check_branch
          %171 = sbr.rel (%p169) target = $region16
        $region15: #{tpu_custom_call.1} parent=11 // pred_region
          %s173 = ssub.s32 3072, 3072
          %174 = vsyncadd [#allocation7], %s173
          %s175 = sshll.u32 [#allocation6], 4
          %s176 = int_to_ptr.vmem [resolvable:$true] %s175
          %181 = dma.hbm_to_vmem [thread:$0]  %s1, 3072, %s176, [#allocation7], 64, 64, 4
        $region16: #{tpu_custom_call.1} parent=11 // pred_fallthru
          _
        // Predicated region
        $region17: #{tpu_custom_call.1} parent=11 // pred_check
          %p182 = pneg %p86
        $region18: #{tpu_custom_call.1} parent=11 // pred_check_branch
          %184 = sbr.rel (%p182) target = $region20
        $region19: #{tpu_custom_call.1} parent=11 // pred_region
          _
        $region20: #{tpu_custom_call.1} parent=11 // pred_fallthru
          _
        // Predicated region
        $region21: #{tpu_custom_call.1} parent=11 // pred_check
          %p185 = pneg %p107
        $region22: #{tpu_custom_call.1} parent=11 // pred_check_branch
          %187 = sbr.rel (%p185) target = $region24
        $region23: #{tpu_custom_call.1} parent=11 // pred_region
          %s189 = ssub.s32 3072, 3072
          %190 = vsyncadd [#allocation7], %s189
          %s191 = sshll.u32 [#allocation8], 4
          %s192 = int_to_ptr.vmem [resolvable:$true] %s191
          %197 = dma.hbm_to_vmem [thread:$0]  %s3, 3072, %s192, [#allocation7], 64, 64, 4
        $region24: #{tpu_custom_call.1} parent=11 // pred_fallthru
          _
        // Predicated region
        $region25: #{tpu_custom_call.1} parent=11 // pred_check
          %p198 = pneg %p128
        $region26: #{tpu_custom_call.1} parent=11 // pred_check_branch
          %200 = sbr.rel (%p198) target = $region28
        $region27: #{tpu_custom_call.1} parent=11 // pred_region
          _
        $region28: #{tpu_custom_call.1} parent=11 // pred_fallthru
          _
      $region12: #{tpu_custom_call.1} parent=5 // pred_fallthru
        _
      %p201 = scmp.lt.s32.totalorder %s18, 2
      // Predicated region
      $region29: #{tpu_custom_call.1} parent=5 // pred_check
        %p202 = pneg %p201
      $region30: #{tpu_custom_call.1} parent=5 // pred_check_branch
        %204 = sbr.rel (%p202) target = $region32
      $region31: #{tpu_custom_call.1} parent=5 // pred_region
        // Predicated region
        $region33: #{tpu_custom_call.1} parent=31 // pred_check
          %p205 = pneg %p38
        $region34: #{tpu_custom_call.1} parent=31 // pred_check_branch
          %207 = sbr.rel (%p205) target = $region36
        $region35: #{tpu_custom_call.1} parent=31 // pred_region
          %s208 = sand.u32 %s28, 1
          %s209 = scalar_lea.sflag [#allocation4], %s208
          %s210 = sand.u32 %s28, 1
          %s211 = smul.addr %s210, 256
          %s212 = scalar_lea.vmem [#allocation3], %s211
          %s214 = ssub.s32 4096, 4096
          %215 = vsyncadd %s209, %s214
          %s216 = smul.addr %s18, 32
          %s217 = smul.addr %s216, 128
          %s218 = scalar_lea.hbm %s0, %s217
          %s219 = sshll.u32 %s212, 4
          %s220 = int_to_ptr.vmem [resolvable:$true] %s219
          %225 = dma.hbm_to_vmem [thread:$0]  %s218, 4096, %s220, %s209, 128, 128, 8
        $region36: #{tpu_custom_call.1} parent=31 // pred_fallthru
          _
      $region32: #{tpu_custom_call.1} parent=5 // pred_fallthru
        _
      %p226 = scmp.le.s32.totalorder 1, %s18
      %p227 = scmp.lt.s32.totalorder %s18, 3
      %p228 = pnand %p226, %p227
      %p229 = pneg %p228
      // Predicated region
      $region37: #{tpu_custom_call.1} parent=5 // pred_check
        _
      $region38: #{tpu_custom_call.1} parent=5 // pred_check_branch
        %231 = sbr.rel (%p228) target = $region40
      $region39: #{tpu_custom_call.1} parent=5 // pred_region
        %s232 = ssub.s32 %s18, 1
        %s233 = sand.u32 %s31, 1
        %s234 = scalar_lea.sflag [#allocation4], %s233
        %s235 = sand.u32 %s31, 1
        %s236 = smul.addr %s235, 256
        %s237 = scalar_lea.vmem [#allocation3], %s236
        // Predicated region
        $region41: #{tpu_custom_call.1} parent=39 // pred_check
          %p238 = pneg %p44
        $region42: #{tpu_custom_call.1} parent=39 // pred_check_branch
          %240 = sbr.rel (%p238) target = $region44
        $region43: #{tpu_custom_call.1} parent=39 // pred_region
          %241 = dma.done %s234, 4096
        $region44: #{tpu_custom_call.1} parent=39 // pred_fallthru
          _
        // Predicated region
        $region45: #{tpu_custom_call.1} parent=39 // pred_check
          %p242 = pneg %p65
        $region46: #{tpu_custom_call.1} parent=39 // pred_check_branch
          %244 = sbr.rel (%p242) target = $region48
        $region47: #{tpu_custom_call.1} parent=39 // pred_region
          %245 = dma.done [#allocation7], 3072
        $region48: #{tpu_custom_call.1} parent=39 // pred_fallthru
          _
        // Predicated region
        $region49: #{tpu_custom_call.1} parent=39 // pred_check
          %p246 = pneg %p107
        $region50: #{tpu_custom_call.1} parent=39 // pred_check_branch
          %248 = sbr.rel (%p246) target = $region52
        $region51: #{tpu_custom_call.1} parent=39 // pred_region
          %249 = dma.done [#allocation7], 3072
        $region52: #{tpu_custom_call.1} parent=39 // pred_fallthru
          _
        %s250 = sand.u32 %s31, 1
        %s251 = scalar_lea.sflag [#allocation4], %s250
        %s252 = sand.u32 %s31, 1
        %s253 = smul.addr %s252, 256
        %s254 = scalar_lea.vmem [#allocation3], %s253
        %p255 = pneg %p44
        %p256 = pneg %p41
        %p257 = pneg %p65
        %p258 = pneg %p62
        %p259 = pneg %p86
        %p260 = pneg %p83
        %p261 = pneg %p107
        %p262 = pneg %p104
        %p263 = pneg %p128
        %p264 = pneg %p125
        %p265 = pneg %p154
        %p266 = pneg %p151
        %s267 = sand.u32 %s141, 1
        %s268 = scalar_lea.sflag [#allocation5], %s267
        %s269 = sand.u32 %s141, 1
        %s270 = smul.addr %s269, 256
        %s271 = scalar_lea.vmem [#allocation9], %s270
        %v273 = vld [vmem:[%s237] sm:$0xff]
        %v274 = vld [vmem:[%s237 + $0x8] sm:$0xff]
        %v275 = vld [vmem:[%s237 + $0x10] sm:$0xff]
        %v276 = vld [vmem:[%s237 + $0x18] sm:$0xff]
        %v277 = vld [vmem:[%s237 + $0x20] sm:$0xff]
        %v278 = vld [vmem:[%s237 + $0x28] sm:$0xff]
        %v279 = vld [vmem:[%s237 + $0x30] sm:$0xff]
        %v280 = vld [vmem:[%s237 + $0x38] sm:$0xff]
        %v281 = vld [vmem:[%s237 + $0x40] sm:$0xff]
        %v282 = vld [vmem:[%s237 + $0x48] sm:$0xff]
        %v283 = vld [vmem:[%s237 + $0x50] sm:$0xff]
        %v284 = vld [vmem:[%s237 + $0x58] sm:$0xff]
        %v285 = vld [vmem:[%s237 + $0x60] sm:$0xff]
        %v286 = vld [vmem:[%s237 + $0x68] sm:$0xff]
        %v287 = vld [vmem:[%s237 + $0x70] sm:$0xff]
        %v288 = vld [vmem:[%s237 + $0x78] sm:$0xff]
        %v289 = vld [vmem:[%s237 + $0x80] sm:$0xff]
        %v290 = vld [vmem:[%s237 + $0x88] sm:$0xff]
        %v291 = vld [vmem:[%s237 + $0x90] sm:$0xff]
        %v292 = vld [vmem:[%s237 + $0x98] sm:$0xff]
        %v293 = vld [vmem:[%s237 + $0xa0] sm:$0xff]
        %v294 = vld [vmem:[%s237 + $0xa8] sm:$0xff]
        %v295 = vld [vmem:[%s237 + $0xb0] sm:$0xff]
        %v296 = vld [vmem:[%s237 + $0xb8] sm:$0xff]
        %v297 = vld [vmem:[%s237 + $0xc0] sm:$0xff]
        %v298 = vld [vmem:[%s237 + $0xc8] sm:$0xff]
        %v299 = vld [vmem:[%s237 + $0xd0] sm:$0xff]
        %v300 = vld [vmem:[%s237 + $0xd8] sm:$0xff]
        %v301 = vld [vmem:[%s237 + $0xe0] sm:$0xff]
        %v302 = vld [vmem:[%s237 + $0xe8] sm:$0xff]
        %v303 = vld [vmem:[%s237 + $0xf0] sm:$0xff]
        %v304 = vld [vmem:[%s237 + $0xf8] sm:$0xff]
        %305 = vst [vmem:[#allocation2] sm:$0x1] 0.0
        %vm338 = vcmask 1040384
        %v339 = vrot.slane %v273, 7
        %v340 = vrot.slane %v274, 7
        %v341 = vsel %vm338, %v339, %v340
        %v342 = vrot.slane %v275, 7
        %v343 = vsel %vm338, %v340, %v342
        %v344 = vrot.slane %v276, 7
        %v345 = vsel %vm338, %v342, %v344
        %v346 = vrot.slane %v277, 7
        %v347 = vsel %vm338, %v344, %v346
        %v348 = vrot.slane %v278, 7
        %v349 = vsel %vm338, %v346, %v348
        %v350 = vrot.slane %v279, 7
        %v351 = vsel %vm338, %v348, %v350
        %v352 = vrot.slane %v280, 7
        %v353 = vsel %vm338, %v350, %v352
        %v354 = vrot.slane %v281, 7
        %v355 = vsel %vm338, %v352, %v354
        %v356 = vrot.slane %v282, 7
        %v357 = vsel %vm338, %v354, %v356
        %v358 = vrot.slane %v283, 7
        %v359 = vsel %vm338, %v356, %v358
        %v360 = vrot.slane %v284, 7
        %v361 = vsel %vm338, %v358, %v360
        %v362 = vrot.slane %v285, 7
        %v363 = vsel %vm338, %v360, %v362
        %v364 = vrot.slane %v286, 7
        %v365 = vsel %vm338, %v362, %v364
        %v366 = vrot.slane %v287, 7
        %v367 = vsel %vm338, %v364, %v366
        %v368 = vrot.slane %v288, 7
        %v369 = vsel %vm338, %v366, %v368
        %v370 = vrot.slane %v289, 7
        %v371 = vsel %vm338, %v368, %v370
        %v372 = vrot.slane %v290, 7
        %v373 = vsel %vm338, %v370, %v372
        %v374 = vrot.slane %v291, 7
        %v375 = vsel %vm338, %v372, %v374
        %v376 = vrot.slane %v292, 7
        %v377 = vsel %vm338, %v374, %v376
        %v378 = vrot.slane %v293, 7
        %v379 = vsel %vm338, %v376, %v378
        %v380 = vrot.slane %v294, 7
        %v381 = vsel %vm338, %v378, %v380
        %v382 = vrot.slane %v295, 7
        %v383 = vsel %vm338, %v380, %v382
        %v384 = vrot.slane %v296, 7
        %v385 = vsel %vm338, %v382, %v384
        %v386 = vrot.slane %v297, 7
        %v387 = vsel %vm338, %v384, %v386
        %v388 = vrot.slane %v298, 7
        %v389 = vsel %vm338, %v386, %v388
        %v390 = vrot.slane %v299, 7
        %v391 = vsel %vm338, %v388, %v390
        %v392 = vrot.slane %v300, 7
        %v393 = vsel %vm338, %v390, %v392
        %v394 = vrot.slane %v301, 7
        %v395 = vsel %vm338, %v392, %v394
        %v396 = vrot.slane %v302, 7
        %v397 = vsel %vm338, %v394, %v396
        %v398 = vrot.slane %v303, 7
        %v399 = vsel %vm338, %v396, %v398
        %v400 = vrot.slane %v304, 7
        %v401 = vsel %vm338, %v398, %v400
        %434 = vst [vmem:[#allocation2] sm:$0xfe] %v339
        %435 = vst [vmem:[#allocation2 + $0x18] sm:$0xff] %v341
        %436 = vst [vmem:[#allocation2 + $0x30] sm:$0xff] %v343
        %437 = vst [vmem:[#allocation2 + $0x48] sm:$0xff] %v345
        %438 = vst [vmem:[#allocation2 + $0x60] sm:$0xff] %v347
        %439 = vst [vmem:[#allocation2 + $0x78] sm:$0xff] %v349
        %440 = vst [vmem:[#allocation2 + $0x90] sm:$0xff] %v351
        %441 = vst [vmem:[#allocation2 + $0xa8] sm:$0xff] %v353
        %442 = vst [vmem:[#allocation2 + $0xc0] sm:$0xff] %v355
        %443 = vst [vmem:[#allocation2 + $0xd8] sm:$0xff] %v357
        %444 = vst [vmem:[#allocation2 + $0xf0] sm:$0xff] %v359
        %445 = vst [vmem:[#allocation2 + $0x108] sm:$0xff] %v361
        %446 = vst [vmem:[#allocation2 + $0x120] sm:$0xff] %v363
        %447 = vst [vmem:[#allocation2 + $0x138] sm:$0xff] %v365
        %448 = vst [vmem:[#allocation2 + $0x150] sm:$0xff] %v367
        %449 = vst [vmem:[#allocation2 + $0x168] sm:$0xff] %v369
        %450 = vst [vmem:[#allocation2 + $0x180] sm:$0xff] %v371
        %451 = vst [vmem:[#allocation2 + $0x198] sm:$0xff] %v373
        %452 = vst [vmem:[#allocation2 + $0x1b0] sm:$0xff] %v375
        %453 = vst [vmem:[#allocation2 + $0x1c8] sm:$0xff] %v377
        %454 = vst [vmem:[#allocation2 + $0x1e0] sm:$0xff] %v379
        %455 = vst [vmem:[#allocation2 + $0x1f8] sm:$0xff] %v381
        %456 = vst [vmem:[#allocation2 + $0x210] sm:$0xff] %v383
        %457 = vst [vmem:[#allocation2 + $0x228] sm:$0xff] %v385
        %458 = vst [vmem:[#allocation2 + $0x240] sm:$0xff] %v387
        %459 = vst [vmem:[#allocation2 + $0x258] sm:$0xff] %v389
        %460 = vst [vmem:[#allocation2 + $0x270] sm:$0xff] %v391
        %461 = vst [vmem:[#allocation2 + $0x288] sm:$0xff] %v393
        %462 = vst [vmem:[#allocation2 + $0x2a0] sm:$0xff] %v395
        %463 = vst [vmem:[#allocation2 + $0x2b8] sm:$0xff] %v397
        %464 = vst [vmem:[#allocation2 + $0x2d0] sm:$0xff] %v399
        %465 = vst [vmem:[#allocation2 + $0x2e8] sm:$0xff] %v401
        %466 = vst [vmem:[#allocation2 + $0x8] sm:$0xff] %v273
        %467 = vst [vmem:[#allocation2 + $0x20] sm:$0xff] %v274
        %468 = vst [vmem:[#allocation2 + $0x38] sm:$0xff] %v275
        %469 = vst [vmem:[#allocation2 + $0x50] sm:$0xff] %v276
        %470 = vst [vmem:[#allocation2 + $0x68] sm:$0xff] %v277
        %471 = vst [vmem:[#allocation2 + $0x80] sm:$0xff] %v278
        %472 = vst [vmem:[#allocation2 + $0x98] sm:$0xff] %v279
        %473 = vst [vmem:[#allocation2 + $0xb0] sm:$0xff] %v280
        %474 = vst [vmem:[#allocation2 + $0xc8] sm:$0xff] %v281
        %475 = vst [vmem:[#allocation2 + $0xe0] sm:$0xff] %v282
        %476 = vst [vmem:[#allocation2 + $0xf8] sm:$0xff] %v283
        %477 = vst [vmem:[#allocation2 + $0x110] sm:$0xff] %v284
        %478 = vst [vmem:[#allocation2 + $0x128] sm:$0xff] %v285
        %479 = vst [vmem:[#allocation2 + $0x140] sm:$0xff] %v286
        %480 = vst [vmem:[#allocation2 + $0x158] sm:$0xff] %v287
        %481 = vst [vmem:[#allocation2 + $0x170] sm:$0xff] %v288
        %482 = vst [vmem:[#allocation2 + $0x188] sm:$0xff] %v289
        %483 = vst [vmem:[#allocation2 + $0x1a0] sm:$0xff] %v290
        %484 = vst [vmem:[#allocation2 + $0x1b8] sm:$0xff] %v291
        %485 = vst [vmem:[#allocation2 + $0x1d0] sm:$0xff] %v292
        %486 = vst [vmem:[#allocation2 + $0x1e8] sm:$0xff] %v293
        %487 = vst [vmem:[#allocation2 + $0x200] sm:$0xff] %v294
        %488 = vst [vmem:[#allocation2 + $0x218] sm:$0xff] %v295
        %489 = vst [vmem:[#allocation2 + $0x230] sm:$0xff] %v296
        %490 = vst [vmem:[#allocation2 + $0x248] sm:$0xff] %v297
        %491 = vst [vmem:[#allocation2 + $0x260] sm:$0xff] %v298
        %492 = vst [vmem:[#allocation2 + $0x278] sm:$0xff] %v299
        %493 = vst [vmem:[#allocation2 + $0x290] sm:$0xff] %v300
        %494 = vst [vmem:[#allocation2 + $0x2a8] sm:$0xff] %v301
        %495 = vst [vmem:[#allocation2 + $0x2c0] sm:$0xff] %v302
        %496 = vst [vmem:[#allocation2 + $0x2d8] sm:$0xff] %v303
        %497 = vst [vmem:[#allocation2 + $0x2f0] sm:$0xff] %v304
        %vm498 = vcmask 1046528
        %v499 = vrot.slane %v273, 1
        %v500 = vrot.slane %v274, 1
        %v501 = vsel %vm498, %v499, %v500
        %v502 = vrot.slane %v275, 1
        %v503 = vsel %vm498, %v500, %v502
        %v504 = vrot.slane %v276, 1
        %v505 = vsel %vm498, %v502, %v504
        %v506 = vrot.slane %v277, 1
        %v507 = vsel %vm498, %v504, %v506
        %v508 = vrot.slane %v278, 1
        %v509 = vsel %vm498, %v506, %v508
        %v510 = vrot.slane %v279, 1
        %v511 = vsel %vm498, %v508, %v510
        %v512 = vrot.slane %v280, 1
        %v513 = vsel %vm498, %v510, %v512
        %v514 = vrot.slane %v281, 1
        %v515 = vsel %vm498, %v512, %v514
        %v516 = vrot.slane %v282, 1
        %v517 = vsel %vm498, %v514, %v516
        %v518 = vrot.slane %v283, 1
        %v519 = vsel %vm498, %v516, %v518
        %v520 = vrot.slane %v284, 1
        %v521 = vsel %vm498, %v518, %v520
        %v522 = vrot.slane %v285, 1
        %v523 = vsel %vm498, %v520, %v522
        %v524 = vrot.slane %v286, 1
        %v525 = vsel %vm498, %v522, %v524
        %v526 = vrot.slane %v287, 1
        %v527 = vsel %vm498, %v524, %v526
        %v528 = vrot.slane %v288, 1
        %v529 = vsel %vm498, %v526, %v528
        %v530 = vrot.slane %v289, 1
        %v531 = vsel %vm498, %v528, %v530
        %v532 = vrot.slane %v290, 1
        %v533 = vsel %vm498, %v530, %v532
        %v534 = vrot.slane %v291, 1
        %v535 = vsel %vm498, %v532, %v534
        %v536 = vrot.slane %v292, 1
        %v537 = vsel %vm498, %v534, %v536
        %v538 = vrot.slane %v293, 1
        %v539 = vsel %vm498, %v536, %v538
        %v540 = vrot.slane %v294, 1
        %v541 = vsel %vm498, %v538, %v540
        %v542 = vrot.slane %v295, 1
        %v543 = vsel %vm498, %v540, %v542
        %v544 = vrot.slane %v296, 1
        %v545 = vsel %vm498, %v542, %v544
        %v546 = vrot.slane %v297, 1
        %v547 = vsel %vm498, %v544, %v546
        %v548 = vrot.slane %v298, 1
        %v549 = vsel %vm498, %v546, %v548
        %v550 = vrot.slane %v299, 1
        %v551 = vsel %vm498, %v548, %v550
        %v552 = vrot.slane %v300, 1
        %v553 = vsel %vm498, %v550, %v552
        %v554 = vrot.slane %v301, 1
        %v555 = vsel %vm498, %v552, %v554
        %v556 = vrot.slane %v302, 1
        %v557 = vsel %vm498, %v554, %v556
        %v558 = vrot.slane %v303, 1
        %v559 = vsel %vm498, %v556, %v558
        %v560 = vrot.slane %v304, 1
        %v561 = vsel %vm498, %v558, %v560
        %594 = vst [vmem:[#allocation2 + $0x10] sm:$0xff] %v501
        %595 = vst [vmem:[#allocation2 + $0x28] sm:$0xff] %v503
        %596 = vst [vmem:[#allocation2 + $0x40] sm:$0xff] %v505
        %597 = vst [vmem:[#allocation2 + $0x58] sm:$0xff] %v507
        %598 = vst [vmem:[#allocation2 + $0x70] sm:$0xff] %v509
        %599 = vst [vmem:[#allocation2 + $0x88] sm:$0xff] %v511
        %600 = vst [vmem:[#allocation2 + $0xa0] sm:$0xff] %v513
        %601 = vst [vmem:[#allocation2 + $0xb8] sm:$0xff] %v515
        %602 = vst [vmem:[#allocation2 + $0xd0] sm:$0xff] %v517
        %603 = vst [vmem:[#allocation2 + $0xe8] sm:$0xff] %v519
        %604 = vst [vmem:[#allocation2 + $0x100] sm:$0xff] %v521
        %605 = vst [vmem:[#allocation2 + $0x118] sm:$0xff] %v523
        %606 = vst [vmem:[#allocation2 + $0x130] sm:$0xff] %v525
        %607 = vst [vmem:[#allocation2 + $0x148] sm:$0xff] %v527
        %608 = vst [vmem:[#allocation2 + $0x160] sm:$0xff] %v529
        %609 = vst [vmem:[#allocation2 + $0x178] sm:$0xff] %v531
        %610 = vst [vmem:[#allocation2 + $0x190] sm:$0xff] %v533
        %611 = vst [vmem:[#allocation2 + $0x1a8] sm:$0xff] %v535
        %612 = vst [vmem:[#allocation2 + $0x1c0] sm:$0xff] %v537
        %613 = vst [vmem:[#allocation2 + $0x1d8] sm:$0xff] %v539
        %614 = vst [vmem:[#allocation2 + $0x1f0] sm:$0xff] %v541
        %615 = vst [vmem:[#allocation2 + $0x208] sm:$0xff] %v543
        %616 = vst [vmem:[#allocation2 + $0x220] sm:$0xff] %v545
        %617 = vst [vmem:[#allocation2 + $0x238] sm:$0xff] %v547
        %618 = vst [vmem:[#allocation2 + $0x250] sm:$0xff] %v549
        %619 = vst [vmem:[#allocation2 + $0x268] sm:$0xff] %v551
        %620 = vst [vmem:[#allocation2 + $0x280] sm:$0xff] %v553
        %621 = vst [vmem:[#allocation2 + $0x298] sm:$0xff] %v555
        %622 = vst [vmem:[#allocation2 + $0x2b0] sm:$0xff] %v557
        %623 = vst [vmem:[#allocation2 + $0x2c8] sm:$0xff] %v559
        %624 = vst [vmem:[#allocation2 + $0x2e0] sm:$0xff] %v561
        %625 = vst [vmem:[#allocation2 + $0x2f8] sm:$0x7f] %v560
        %626 = vst [vmem:[#allocation2 + $0x2ff] sm:$0x1] 0.0
        %v627 = vld [vmem:[#allocation2] sm:$0xff]
        %v628 = vld [vmem:[#allocation2 + $0x8] sm:$0xff]
        %v629 = vld [vmem:[#allocation2 + $0x10] sm:$0xff]
        %v630 = vld [vmem:[#allocation2 + $0x18] sm:$0xff]
        %v631 = vld [vmem:[#allocation2 + $0x20] sm:$0xff]
        %v632 = vld [vmem:[#allocation2 + $0x28] sm:$0xff]
        %v633 = vld [vmem:[#allocation2 + $0x30] sm:$0xff]
        %v634 = vld [vmem:[#allocation2 + $0x38] sm:$0xff]
        %v635 = vld [vmem:[#allocation2 + $0x40] sm:$0xff]
        %v636 = vld [vmem:[#allocation2 + $0x48] sm:$0xff]
        %v637 = vld [vmem:[#allocation2 + $0x50] sm:$0xff]
        %v638 = vld [vmem:[#allocation2 + $0x58] sm:$0xff]
        %v639 = vld [vmem:[#allocation2 + $0x60] sm:$0xff]
        %v640 = vld [vmem:[#allocation2 + $0x68] sm:$0xff]
        %v641 = vld [vmem:[#allocation2 + $0x70] sm:$0xff]
        %v642 = vld [vmem:[#allocation2 + $0x78] sm:$0xff]
        %v643 = vld [vmem:[#allocation2 + $0x80] sm:$0xff]
        %v644 = vld [vmem:[#allocation2 + $0x88] sm:$0xff]
        %v645 = vld [vmem:[#allocation2 + $0x90] sm:$0xff]
        %v646 = vld [vmem:[#allocation2 + $0x98] sm:$0xff]
        %v647 = vld [vmem:[#allocation2 + $0xa0] sm:$0xff]
        %v648 = vld [vmem:[#allocation2 + $0xa8] sm:$0xff]
        %v649 = vld [vmem:[#allocation2 + $0xb0] sm:$0xff]
        %v650 = vld [vmem:[#allocation2 + $0xb8] sm:$0xff]
        %v651 = vld [vmem:[#allocation2 + $0xc0] sm:$0xff]
        %v652 = vld [vmem:[#allocation2 + $0xc8] sm:$0xff]
        %v653 = vld [vmem:[#allocation2 + $0xd0] sm:$0xff]
        %v654 = vld [vmem:[#allocation2 + $0xd8] sm:$0xff]
        %v655 = vld [vmem:[#allocation2 + $0xe0] sm:$0xff]
        %v656 = vld [vmem:[#allocation2 + $0xe8] sm:$0xff]
        %v657 = vld [vmem:[#allocation2 + $0xf0] sm:$0xff]
        %v658 = vld [vmem:[#allocation2 + $0xf8] sm:$0xff]
        %v659 = vld [vmem:[#allocation2 + $0x100] sm:$0xff]
        %v660 = vld [vmem:[#allocation2 + $0x108] sm:$0xff]
        %v661 = vld [vmem:[#allocation2 + $0x110] sm:$0xff]
        %v662 = vld [vmem:[#allocation2 + $0x118] sm:$0xff]
        %v663 = vld [vmem:[#allocation2 + $0x120] sm:$0xff]
        %v664 = vld [vmem:[#allocation2 + $0x128] sm:$0xff]
        %v665 = vld [vmem:[#allocation2 + $0x130] sm:$0xff]
        %v666 = vld [vmem:[#allocation2 + $0x138] sm:$0xff]
        %v667 = vld [vmem:[#allocation2 + $0x140] sm:$0xff]
        %v668 = vld [vmem:[#allocation2 + $0x148] sm:$0xff]
        %v669 = vld [vmem:[#allocation2 + $0x150] sm:$0xff]
        %v670 = vld [vmem:[#allocation2 + $0x158] sm:$0xff]
        %v671 = vld [vmem:[#allocation2 + $0x160] sm:$0xff]
        %v672 = vld [vmem:[#allocation2 + $0x168] sm:$0xff]
        %v673 = vld [vmem:[#allocation2 + $0x170] sm:$0xff]
        %v674 = vld [vmem:[#allocation2 + $0x178] sm:$0xff]
        %v675 = vld [vmem:[#allocation2 + $0x180] sm:$0xff]
        %v676 = vld [vmem:[#allocation2 + $0x188] sm:$0xff]
        %v677 = vld [vmem:[#allocation2 + $0x190] sm:$0xff]
        %v678 = vld [vmem:[#allocation2 + $0x198] sm:$0xff]
        %v679 = vld [vmem:[#allocation2 + $0x1a0] sm:$0xff]
        %v680 = vld [vmem:[#allocation2 + $0x1a8] sm:$0xff]
        %v681 = vld [vmem:[#allocation2 + $0x1b0] sm:$0xff]
        %v682 = vld [vmem:[#allocation2 + $0x1b8] sm:$0xff]
        %v683 = vld [vmem:[#allocation2 + $0x1c0] sm:$0xff]
        %v684 = vld [vmem:[#allocation2 + $0x1c8] sm:$0xff]
        %v685 = vld [vmem:[#allocation2 + $0x1d0] sm:$0xff]
        %v686 = vld [vmem:[#allocation2 + $0x1d8] sm:$0xff]
        %v687 = vld [vmem:[#allocation2 + $0x1e0] sm:$0xff]
        %v688 = vld [vmem:[#allocation2 + $0x1e8] sm:$0xff]
        %v689 = vld [vmem:[#allocation2 + $0x1f0] sm:$0xff]
        %v690 = vld [vmem:[#allocation2 + $0x1f8] sm:$0xff]
        %v691 = vld [vmem:[#allocation2 + $0x200] sm:$0xff]
        %v692 = vld [vmem:[#allocation2 + $0x208] sm:$0xff]
        %v693 = vld [vmem:[#allocation2 + $0x210] sm:$0xff]
        %v694 = vld [vmem:[#allocation2 + $0x218] sm:$0xff]
        %v695 = vld [vmem:[#allocation2 + $0x220] sm:$0xff]
        %v696 = vld [vmem:[#allocation2 + $0x228] sm:$0xff]
        %v697 = vld [vmem:[#allocation2 + $0x230] sm:$0xff]
        %v698 = vld [vmem:[#allocation2 + $0x238] sm:$0xff]
        %v699 = vld [vmem:[#allocation2 + $0x240] sm:$0xff]
        %v700 = vld [vmem:[#allocation2 + $0x248] sm:$0xff]
        %v701 = vld [vmem:[#allocation2 + $0x250] sm:$0xff]
        %v702 = vld [vmem:[#allocation2 + $0x258] sm:$0xff]
        %v703 = vld [vmem:[#allocation2 + $0x260] sm:$0xff]
        %v704 = vld [vmem:[#allocation2 + $0x268] sm:$0xff]
        %v705 = vld [vmem:[#allocation2 + $0x270] sm:$0xff]
        %v706 = vld [vmem:[#allocation2 + $0x278] sm:$0xff]
        %v707 = vld [vmem:[#allocation2 + $0x280] sm:$0xff]
        %v708 = vld [vmem:[#allocation2 + $0x288] sm:$0xff]
        %v709 = vld [vmem:[#allocation2 + $0x290] sm:$0xff]
        %v710 = vld [vmem:[#allocation2 + $0x298] sm:$0xff]
        %v711 = vld [vmem:[#allocation2 + $0x2a0] sm:$0xff]
        %v712 = vld [vmem:[#allocation2 + $0x2a8] sm:$0xff]
        %v713 = vld [vmem:[#allocation2 + $0x2b0] sm:$0xff]
        %v714 = vld [vmem:[#allocation2 + $0x2b8] sm:$0xff]
        %v715 = vld [vmem:[#allocation2 + $0x2c0] sm:$0xff]
        %v716 = vld [vmem:[#allocation2 + $0x2c8] sm:$0xff]
        %v717 = vld [vmem:[#allocation2 + $0x2d0] sm:$0xff]
        %v718 = vld [vmem:[#allocation2 + $0x2d8] sm:$0xff]
        %v719 = vld [vmem:[#allocation2 + $0x2e0] sm:$0xff]
        %v720 = vld [vmem:[#allocation2 + $0x2e8] sm:$0xff]
        %v721 = vld [vmem:[#allocation2 + $0x2f0] sm:$0xff]
        %v722 = vld [vmem:[#allocation2 + $0x2f8] sm:$0xff]
        %v723 = vpack.c.bf16 %v630, %v627
        %v724 = vpack.c.bf16 %v631, %v628
        %v725 = vpack.c.bf16 %v632, %v629
        %v726 = vpack.c.bf16 %v636, %v633
        %v727 = vpack.c.bf16 %v637, %v634
        %v728 = vpack.c.bf16 %v638, %v635
        %v729 = vpack.c.bf16 %v642, %v639
        %v730 = vpack.c.bf16 %v643, %v640
        %v731 = vpack.c.bf16 %v644, %v641
        %v732 = vpack.c.bf16 %v648, %v645
        %v733 = vpack.c.bf16 %v649, %v646
        %v734 = vpack.c.bf16 %v650, %v647
        %v735 = vpack.c.bf16 %v654, %v651
        %v736 = vpack.c.bf16 %v655, %v652
        %v737 = vpack.c.bf16 %v656, %v653
        %v738 = vpack.c.bf16 %v660, %v657
        %v739 = vpack.c.bf16 %v661, %v658
        %v740 = vpack.c.bf16 %v662, %v659
        %v741 = vpack.c.bf16 %v666, %v663
        %v742 = vpack.c.bf16 %v667, %v664
        %v743 = vpack.c.bf16 %v668, %v665
        %v744 = vpack.c.bf16 %v672, %v669
        %v745 = vpack.c.bf16 %v673, %v670
        %v746 = vpack.c.bf16 %v674, %v671
        %v747 = vpack.c.bf16 %v678, %v675
        %v748 = vpack.c.bf16 %v679, %v676
        %v749 = vpack.c.bf16 %v680, %v677
        %v750 = vpack.c.bf16 %v684, %v681
        %v751 = vpack.c.bf16 %v685, %v682
        %v752 = vpack.c.bf16 %v686, %v683
        %v753 = vpack.c.bf16 %v690, %v687
        %v754 = vpack.c.bf16 %v691, %v688
        %v755 = vpack.c.bf16 %v692, %v689
        %v756 = vpack.c.bf16 %v696, %v693
        %v757 = vpack.c.bf16 %v697, %v694
        %v758 = vpack.c.bf16 %v698, %v695
        %v759 = vpack.c.bf16 %v702, %v699
        %v760 = vpack.c.bf16 %v703, %v700
        %v761 = vpack.c.bf16 %v704, %v701
        %v762 = vpack.c.bf16 %v708, %v705
        %v763 = vpack.c.bf16 %v709, %v706
        %v764 = vpack.c.bf16 %v710, %v707
        %v765 = vpack.c.bf16 %v714, %v711
        %v766 = vpack.c.bf16 %v715, %v712
        %v767 = vpack.c.bf16 %v716, %v713
        %v768 = vpack.c.bf16 %v720, %v717
        %v769 = vpack.c.bf16 %v721, %v718
        %v770 = vpack.c.bf16 %v722, %v719
        %v771 = vld [vmem:[#allocation6] sm:$0xf]
        %v772 = vld [vmem:[#allocation6 + $0x4] sm:$0xf]
        %v773 = vld [vmem:[#allocation6 + $0x8] sm:$0xf]
        %v774 = vld [vmem:[#allocation6 + $0xc] sm:$0xf]
        %v775 = vld [vmem:[#allocation6 + $0x10] sm:$0xf]
        %v776 = vld [vmem:[#allocation6 + $0x14] sm:$0xf]
        %v777 = vld [vmem:[#allocation6 + $0x18] sm:$0xf]
        %v778 = vld [vmem:[#allocation6 + $0x1c] sm:$0xf]
        %v779 = vld [vmem:[#allocation6 + $0x20] sm:$0xf]
        %v780 = vld [vmem:[#allocation6 + $0x24] sm:$0xf]
        %v781 = vld [vmem:[#allocation6 + $0x28] sm:$0xf]
        %v782 = vld [vmem:[#allocation6 + $0x2c] sm:$0xf]
        %v783 = vld [vmem:[#allocation6 + $0x30] sm:$0xf]
        %v784 = vld [vmem:[#allocation6 + $0x34] sm:$0xf]
        %v785 = vld [vmem:[#allocation6 + $0x38] sm:$0xf]
        %v786 = vld [vmem:[#allocation6 + $0x3c] sm:$0xf]
        %v787 = vld [vmem:[#allocation6 + $0x40] sm:$0xf]
        %v788 = vld [vmem:[#allocation6 + $0x44] sm:$0xf]
        %v789 = vld [vmem:[#allocation6 + $0x48] sm:$0xf]
        %v790 = vld [vmem:[#allocation6 + $0x4c] sm:$0xf]
        %v791 = vld [vmem:[#allocation6 + $0x50] sm:$0xf]
        %v792 = vld [vmem:[#allocation6 + $0x54] sm:$0xf]
        %v793 = vld [vmem:[#allocation6 + $0x58] sm:$0xf]
        %v794 = vld [vmem:[#allocation6 + $0x5c] sm:$0xf]
        %v795 = vld [vmem:[#allocation6 + $0x60] sm:$0xf]
        %v796 = vld [vmem:[#allocation6 + $0x64] sm:$0xf]
        %v797 = vld [vmem:[#allocation6 + $0x68] sm:$0xf]
        %v798 = vld [vmem:[#allocation6 + $0x6c] sm:$0xf]
        %v799 = vld [vmem:[#allocation6 + $0x70] sm:$0xf]
        %v800 = vld [vmem:[#allocation6 + $0x74] sm:$0xf]
        %v801 = vld [vmem:[#allocation6 + $0x78] sm:$0xf]
        %v802 = vld [vmem:[#allocation6 + $0x7c] sm:$0xf]
        %v803 = vld [vmem:[#allocation6 + $0x80] sm:$0xf]
        %v804 = vld [vmem:[#allocation6 + $0x84] sm:$0xf]
        %v805 = vld [vmem:[#allocation6 + $0x88] sm:$0xf]
        %v806 = vld [vmem:[#allocation6 + $0x8c] sm:$0xf]
        %v807 = vld [vmem:[#allocation6 + $0x90] sm:$0xf]
        %v808 = vld [vmem:[#allocation6 + $0x94] sm:$0xf]
        %v809 = vld [vmem:[#allocation6 + $0x98] sm:$0xf]
        %v810 = vld [vmem:[#allocation6 + $0x9c] sm:$0xf]
        %v811 = vld [vmem:[#allocation6 + $0xa0] sm:$0xf]
        %v812 = vld [vmem:[#allocation6 + $0xa4] sm:$0xf]
        %v813 = vld [vmem:[#allocation6 + $0xa8] sm:$0xf]
        %v814 = vld [vmem:[#allocation6 + $0xac] sm:$0xf]
        %v815 = vld [vmem:[#allocation6 + $0xb0] sm:$0xf]
        %v816 = vld [vmem:[#allocation6 + $0xb4] sm:$0xf]
        %v817 = vld [vmem:[#allocation6 + $0xb8] sm:$0xf]
        %v818 = vld [vmem:[#allocation6 + $0xbc] sm:$0xf]
        %v819 = vld [vmem:[%s2] sm:$0x1]
        %v821 = vlaneseq
        %v822 = vshrl.u32 %v821, 7
        %v823 = vsub.s32 0, %v822
        %v824 = vrot.slane %v819, %v823
        %v874 = vunpack.c.l.b16 %v771
        %v875 = vunpack.c.l.b16 %v772
        %v876 = vunpack.c.l.b16 %v773
        %v877 = vunpack.c.l.b16 %v774
        %v878 = vunpack.c.l.b16 %v775
        %v879 = vunpack.c.l.b16 %v776
        %v880 = vunpack.c.l.b16 %v777
        %v881 = vunpack.c.l.b16 %v778
        %v882 = vunpack.c.l.b16 %v779
        %v883 = vunpack.c.l.b16 %v780
        %v884 = vunpack.c.l.b16 %v781
        %v885 = vunpack.c.l.b16 %v782
        %v886 = vunpack.c.l.b16 %v783
        %v887 = vunpack.c.l.b16 %v784
        %v888 = vunpack.c.l.b16 %v785
        %v889 = vunpack.c.l.b16 %v786
        %v890 = vunpack.c.l.b16 %v787
        %v891 = vunpack.c.l.b16 %v788
        %v892 = vunpack.c.l.b16 %v789
        %v893 = vunpack.c.l.b16 %v790
        %v894 = vunpack.c.l.b16 %v791
        %v895 = vunpack.c.l.b16 %v792
        %v896 = vunpack.c.l.b16 %v793
        %v897 = vunpack.c.l.b16 %v794
        %v898 = vunpack.c.l.b16 %v795
        %v899 = vunpack.c.l.b16 %v796
        %v900 = vunpack.c.l.b16 %v797
        %v901 = vunpack.c.l.b16 %v798
        %v902 = vunpack.c.l.b16 %v799
        %v903 = vunpack.c.l.b16 %v800
        %v904 = vunpack.c.l.b16 %v801
        %v905 = vunpack.c.l.b16 %v802
        %v906 = vunpack.c.l.b16 %v803
        %v907 = vunpack.c.l.b16 %v804
        %v908 = vunpack.c.l.b16 %v805
        %v909 = vunpack.c.l.b16 %v806
        %v910 = vunpack.c.l.b16 %v807
        %v911 = vunpack.c.l.b16 %v808
        %v912 = vunpack.c.l.b16 %v809
        %v913 = vunpack.c.l.b16 %v810
        %v914 = vunpack.c.l.b16 %v811
        %v915 = vunpack.c.l.b16 %v812
        %v916 = vunpack.c.l.b16 %v813
        %v917 = vunpack.c.l.b16 %v814
        %v918 = vunpack.c.l.b16 %v815
        %v919 = vunpack.c.l.b16 %v816
        %v920 = vunpack.c.l.b16 %v817
        %v921 = vunpack.c.l.b16 %v818
        %v922 = vpack.c.b16 %v875, %v874
        %v923 = vpack.c.b16 %v877, %v876
        %v924 = vpack.c.b16 %v879, %v878
        %v925 = vpack.c.b16 %v881, %v880
        %v926 = vpack.c.b16 %v883, %v882
        %v927 = vpack.c.b16 %v885, %v884
        %v928 = vpack.c.b16 %v887, %v886
        %v929 = vpack.c.b16 %v889, %v888
        %v930 = vpack.c.b16 %v891, %v890
        %v931 = vpack.c.b16 %v893, %v892
        %v932 = vpack.c.b16 %v895, %v894
        %v933 = vpack.c.b16 %v897, %v896
        %v934 = vpack.c.b16 %v899, %v898
        %v935 = vpack.c.b16 %v901, %v900
        %v936 = vpack.c.b16 %v903, %v902
        %v937 = vpack.c.b16 %v905, %v904
        %v938 = vpack.c.b16 %v907, %v906
        %v939 = vpack.c.b16 %v909, %v908
        %v940 = vpack.c.b16 %v911, %v910
        %v941 = vpack.c.b16 %v913, %v912
        %v942 = vpack.c.b16 %v915, %v914
        %v943 = vpack.c.b16 %v917, %v916
        %v944 = vpack.c.b16 %v919, %v918
        %v945 = vpack.c.b16 %v921, %v920
        %970 = vmatprep.subr.bf16.mxu0 0
        %971 = vmatpush1.bf16.msra.mxu0 %v922
        %972 = vmatprep.subr.bf16.mxu0 0
        %973 = vmatpush1.bf16.msra.mxu0 %v923
        %974 = vmatprep.subr.bf16.mxu0 0
        %975 = vmatpush1.bf16.msra.mxu0 %v924
        %976 = vmatprep.subr.bf16.mxu0 0
        %977 = vmatpush1.bf16.msra.mxu0 %v925
        %978 = vmatprep.subr.bf16.mxu0 0
        %979 = vmatpush1.bf16.msra.mxu0 %v926
        %980 = vmatprep.subr.bf16.mxu0 0
        %981 = vmatpush1.bf16.msra.mxu0 %v927
        %982 = vmatprep.subr.bf16.mxu0 0
        %983 = vmatpush1.bf16.msra.mxu0 %v928
        %984 = vmatprep.subr.bf16.mxu0 0
        %985 = vmatpush1.bf16.msra.mxu0 %v929
        %986 = vmatprep.subr.bf16.mxu0 0
        %987 = vmatpush1.bf16.msra.mxu0 %v930
        %988 = vmatprep.subr.bf16.mxu0 0
        %989 = vmatpush1.bf16.msra.mxu0 %v931
        %990 = vmatprep.subr.bf16.mxu0 0
        %991 = vmatpush1.bf16.msra.mxu0 %v932
        %992 = vmatprep.subr.bf16.mxu0 0
        %993 = vmatpush1.bf16.msra.mxu0 %v933
        %994 = vmatprep.subr.bf16.mxu0 0
        %995 = vmatpush1.bf16.msra.mxu0 %v934
        %996 = vmatprep.subr.bf16.mxu0 0
        %997 = vmatpush1.bf16.msra.mxu0 %v935
        %998 = vmatprep.subr.bf16.mxu0 0
        %999 = vmatpush1.bf16.msra.mxu0 %v936
        %1000 = vmatprep.subr.bf16.mxu0 0
        %1001 = vmatpush1.bf16.msra.mxu0 %v937
        %1002 = vmatprep.mubr.bf16.mxu0 %v724
        %1003 = vmatmul.mubr.bf16.gmra.mrb[0].mxu0 %v723
        %v1004 = vpop.f32.mrb[0].mxu0
        %v1005 = vadd.f32 %v824, %v1004
        %v1006 = vpop.f32.mrb[0].mxu0
        %v1007 = vpop.f32.mrb[0].mxu0
        %v1008 = vadd.f32 %v824, %v1007
        %v1009 = vpop.f32.mrb[0].mxu0
        %1010 = vmatprep.mubr.bf16.mxu0 %v727
        %1011 = vmatmul.mubr.bf16.gmra.mrb[0].mxu0 %v726
        %v1012 = vpop.f32.mrb[0].mxu0
        %v1013 = vadd.f32 %v824, %v1012
        %v1014 = vpop.f32.mrb[0].mxu0
        %v1015 = vpop.f32.mrb[0].mxu0
        %v1016 = vadd.f32 %v824, %v1015
        %v1017 = vpop.f32.mrb[0].mxu0
        %1018 = vmatprep.mubr.bf16.mxu0 %v730
        %1019 = vmatmul.mubr.bf16.gmra.mrb[0].mxu0 %v729
        %v1020 = vpop.f32.mrb[0].mxu0
        %v1021 = vadd.f32 %v824, %v1020
        %v1022 = vpop.f32.mrb[0].mxu0
        %v1023 = vpop.f32.mrb[0].mxu0
        %v1024 = vadd.f32 %v824, %v1023
        %v1025 = vpop.f32.mrb[0].mxu0
        %1026 = vmatprep.mubr.bf16.mxu0 %v733
        %1027 = vmatmul.mubr.bf16.gmra.mrb[0].mxu0 %v732
        %v1028 = vpop.f32.mrb[0].mxu0
        %v1029 = vadd.f32 %v824, %v1028
        %v1030 = vpop.f32.mrb[0].mxu0
        %v1031 = vpop.f32.mrb[0].mxu0
        %v1032 = vadd.f32 %v824, %v1031
        %v1033 = vpop.f32.mrb[0].mxu0
        %1034 = vmatprep.mubr.bf16.mxu0 %v736
        %1035 = vmatmul.mubr.bf16.gmra.mrb[0].mxu0 %v735
        %v1036 = vpop.f32.mrb[0].mxu0
        %v1037 = vadd.f32 %v824, %v1036
        %v1038 = vpop.f32.mrb[0].mxu0
        %v1039 = vpop.f32.mrb[0].mxu0
        %v1040 = vadd.f32 %v824, %v1039
        %v1041 = vpop.f32.mrb[0].mxu0
        %1042 = vmatprep.mubr.bf16.mxu0 %v739
        %1043 = vmatmul.mubr.bf16.gmra.mrb[0].mxu0 %v738
        %v1044 = vpop.f32.mrb[0].mxu0
        %v1045 = vadd.f32 %v824, %v1044
        %v1046 = vpop.f32.mrb[0].mxu0
        %v1047 = vpop.f32.mrb[0].mxu0
        %v1048 = vadd.f32 %v824, %v1047
        %v1049 = vpop.f32.mrb[0].mxu0
        %1050 = vmatprep.mubr.bf16.mxu0 %v742
        %1051 = vmatmul.mubr.bf16.gmra.mrb[0].mxu0 %v741
        %v1052 = vpop.f32.mrb[0].mxu0
        %v1053 = vadd.f32 %v824, %v1052
        %v1054 = vpop.f32.mrb[0].mxu0
        %v1055 = vpop.f32.mrb[0].mxu0
        %v1056 = vadd.f32 %v824, %v1055
        %v1057 = vpop.f32.mrb[0].mxu0
        %1058 = vmatprep.mubr.bf16.mxu0 %v745
        %1059 = vmatmul.mubr.bf16.gmra.mrb[0].mxu0 %v744
        %v1060 = vpop.f32.mrb[0].mxu0
        %v1061 = vadd.f32 %v824, %v1060
        %v1062 = vpop.f32.mrb[0].mxu0
        %v1063 = vpop.f32.mrb[0].mxu0
        %v1064 = vadd.f32 %v824, %v1063
        %v1065 = vpop.f32.mrb[0].mxu0
        %1066 = vmatprep.mubr.bf16.mxu0 %v748
        %1067 = vmatmul.mubr.bf16.gmra.mrb[0].mxu0 %v747
        %v1068 = vpop.f32.mrb[0].mxu0
        %v1069 = vadd.f32 %v824, %v1068
        %v1070 = vpop.f32.mrb[0].mxu0
        %v1071 = vpop.f32.mrb[0].mxu0
        %v1072 = vadd.f32 %v824, %v1071
        %v1073 = vpop.f32.mrb[0].mxu0
        %1074 = vmatprep.mubr.bf16.mxu0 %v751
        %1075 = vmatmul.mubr.bf16.gmra.mrb[0].mxu0 %v750
        %v1076 = vpop.f32.mrb[0].mxu0
        %v1077 = vadd.f32 %v824, %v1076
        %v1078 = vpop.f32.mrb[0].mxu0
        %v1079 = vpop.f32.mrb[0].mxu0
        %v1080 = vadd.f32 %v824, %v1079
        %v1081 = vpop.f32.mrb[0].mxu0
        %1082 = vmatprep.mubr.bf16.mxu0 %v754
        %1083 = vmatmul.mubr.bf16.gmra.mrb[0].mxu0 %v753
        %v1084 = vpop.f32.mrb[0].mxu0
        %v1085 = vadd.f32 %v824, %v1084
        %v1086 = vpop.f32.mrb[0].mxu0
        %v1087 = vpop.f32.mrb[0].mxu0
        %v1088 = vadd.f32 %v824, %v1087
        %v1089 = vpop.f32.mrb[0].mxu0
        %1090 = vmatprep.mubr.bf16.mxu0 %v757
        %1091 = vmatmul.mubr.bf16.gmra.mrb[0].mxu0 %v756
        %v1092 = vpop.f32.mrb[0].mxu0
        %v1093 = vadd.f32 %v824, %v1092
        %v1094 = vpop.f32.mrb[0].mxu0
        %v1095 = vpop.f32.mrb[0].mxu0
        %v1096 = vadd.f32 %v824, %v1095
        %v1097 = vpop.f32.mrb[0].mxu0
        %1098 = vmatprep.mubr.bf16.mxu0 %v760
        %1099 = vmatmul.mubr.bf16.gmra.mrb[0].mxu0 %v759
        %v1100 = vpop.f32.mrb[0].mxu0
        %v1101 = vadd.f32 %v824, %v1100
        %v1102 = vpop.f32.mrb[0].mxu0
        %v1103 = vpop.f32.mrb[0].mxu0
        %v1104 = vadd.f32 %v824, %v1103
        %v1105 = vpop.f32.mrb[0].mxu0
        %1106 = vmatprep.mubr.bf16.mxu0 %v763
        %1107 = vmatmul.mubr.bf16.gmra.mrb[0].mxu0 %v762
        %v1108 = vpop.f32.mrb[0].mxu0
        %v1109 = vadd.f32 %v824, %v1108
        %v1110 = vpop.f32.mrb[0].mxu0
        %v1111 = vpop.f32.mrb[0].mxu0
        %v1112 = vadd.f32 %v824, %v1111
        %v1113 = vpop.f32.mrb[0].mxu0
        %1114 = vmatprep.mubr.bf16.mxu0 %v766
        %1115 = vmatmul.mubr.bf16.gmra.mrb[0].mxu0 %v765
        %v1116 = vpop.f32.mrb[0].mxu0
        %v1117 = vadd.f32 %v824, %v1116
        %v1118 = vpop.f32.mrb[0].mxu0
        %v1119 = vpop.f32.mrb[0].mxu0
        %v1120 = vadd.f32 %v824, %v1119
        %v1121 = vpop.f32.mrb[0].mxu0
        %1122 = vmatprep.mubr.bf16.mxu0 %v769
        %1123 = vmatmul.mubr.bf16.gmra.mrb[0].mxu0 %v768
        %v1124 = vpop.f32.mrb[0].mxu0
        %v1125 = vadd.f32 %v824, %v1124
        %v1126 = vpop.f32.mrb[0].mxu0
        %v1127 = vpop.f32.mrb[0].mxu0
        %v1128 = vadd.f32 %v824, %v1127
        %v1129 = vpop.f32.mrb[0].mxu0
        %1130 = vdwg.mxu0
        %1131 = vmatprep.subr.bf16.mxu0 0
        %1132 = vmatpush1.bf16.msra.mxu0 %v938
        %1133 = vmatprep.subr.bf16.mxu0 0
        %1134 = vmatpush1.bf16.msra.mxu0 %v939
        %1135 = vmatprep.subr.bf16.mxu0 0
        %1136 = vmatpush1.bf16.msra.mxu0 %v940
        %1137 = vmatprep.subr.bf16.mxu0 0
        %1138 = vmatpush1.bf16.msra.mxu0 %v941
        %1139 = vmatprep.subr.bf16.mxu0 0
        %1140 = vmatpush1.bf16.msra.mxu0 %v942
        %1141 = vmatprep.subr.bf16.mxu0 0
        %1142 = vmatpush1.bf16.msra.mxu0 %v943
        %1143 = vmatprep.subr.bf16.mxu0 0
        %1144 = vmatpush1.bf16.msra.mxu0 %v944
        %1145 = vmatprep.subr.bf16.mxu0 0
        %1146 = vmatpush1.bf16.msra.mxu0 %v945
        %1147 = vmatprep.subr.bf16.mxu0 0
        %1148 = vmatpush1.bf16.msra.mxu0 0
        %1149 = vmatprep.subr.bf16.mxu0 0
        %1150 = vmatpush1.bf16.msra.mxu0 0
        %1151 = vmatprep.subr.bf16.mxu0 0
        %1152 = vmatpush1.bf16.msra.mxu0 0
        %1153 = vmatprep.subr.bf16.mxu0 0
        %1154 = vmatpush1.bf16.msra.mxu0 0
        %1155 = vmatprep.subr.bf16.mxu0 0
        %1156 = vmatpush1.bf16.msra.mxu0 0
        %1157 = vmatprep.subr.bf16.mxu0 0
        %1158 = vmatpush1.bf16.msra.mxu0 0
        %1159 = vmatprep.subr.bf16.mxu0 0
        %1160 = vmatpush1.bf16.msra.mxu0 0
        %1161 = vmatprep.subr.bf16.mxu0 0
        %1162 = vmatpush1.bf16.msra.mxu0 0
        %1163 = vmatprep.mubr.bf16.mxu0 0
        %1164 = vmatmul.mubr.bf16.gmra.mrb[0].mxu0 %v725
        %v1165 = vpop.f32.mrb[0].mxu0
        %v1166 = vadd.f32 %v1005, %v1165
        %v1167 = vpop.f32.mrb[0].mxu0
        %v1168 = vpop.f32.mrb[0].mxu0
        %v1169 = vadd.f32 %v1008, %v1168
        %v1170 = vpop.f32.mrb[0].mxu0
        %1171 = vmatprep.mubr.bf16.mxu0 0
        %1172 = vmatmul.mubr.bf16.gmra.mrb[0].mxu0 %v728
        %v1173 = vpop.f32.mrb[0].mxu0
        %v1174 = vadd.f32 %v1013, %v1173
        %v1175 = vpop.f32.mrb[0].mxu0
        %v1176 = vpop.f32.mrb[0].mxu0
        %v1177 = vadd.f32 %v1016, %v1176
        %v1178 = vpop.f32.mrb[0].mxu0
        %1179 = vmatprep.mubr.bf16.mxu0 0
        %1180 = vmatmul.mubr.bf16.gmra.mrb[0].mxu0 %v731
        %v1181 = vpop.f32.mrb[0].mxu0
        %v1182 = vadd.f32 %v1021, %v1181
        %v1183 = vpop.f32.mrb[0].mxu0
        %v1184 = vpop.f32.mrb[0].mxu0
        %v1185 = vadd.f32 %v1024, %v1184
        %v1186 = vpop.f32.mrb[0].mxu0
        %1187 = vmatprep.mubr.bf16.mxu0 0
        %1188 = vmatmul.mubr.bf16.gmra.mrb[0].mxu0 %v734
        %v1189 = vpop.f32.mrb[0].mxu0
        %v1190 = vadd.f32 %v1029, %v1189
        %v1191 = vpop.f32.mrb[0].mxu0
        %v1192 = vpop.f32.mrb[0].mxu0
        %v1193 = vadd.f32 %v1032, %v1192
        %v1194 = vpop.f32.mrb[0].mxu0
        %1195 = vmatprep.mubr.bf16.mxu0 0
        %1196 = vmatmul.mubr.bf16.gmra.mrb[0].mxu0 %v737
        %v1197 = vpop.f32.mrb[0].mxu0
        %v1198 = vadd.f32 %v1037, %v1197
        %v1199 = vpop.f32.mrb[0].mxu0
        %v1200 = vpop.f32.mrb[0].mxu0
        %v1201 = vadd.f32 %v1040, %v1200
        %v1202 = vpop.f32.mrb[0].mxu0
        %1203 = vmatprep.mubr.bf16.mxu0 0
        %1204 = vmatmul.mubr.bf16.gmra.mrb[0].mxu0 %v740
        %v1205 = vpop.f32.mrb[0].mxu0
        %v1206 = vadd.f32 %v1045, %v1205
        %v1207 = vpop.f32.mrb[0].mxu0
        %v1208 = vpop.f32.mrb[0].mxu0
        %v1209 = vadd.f32 %v1048, %v1208
        %v1210 = vpop.f32.mrb[0].mxu0
        %1211 = vmatprep.mubr.bf16.mxu0 0
        %1212 = vmatmul.mubr.bf16.gmra.mrb[0].mxu0 %v743
        %v1213 = vpop.f32.mrb[0].mxu0
        %v1214 = vadd.f32 %v1053, %v1213
        %v1215 = vpop.f32.mrb[0].mxu0
        %v1216 = vpop.f32.mrb[0].mxu0
        %v1217 = vadd.f32 %v1056, %v1216
        %v1218 = vpop.f32.mrb[0].mxu0
        %1219 = vmatprep.mubr.bf16.mxu0 0
        %1220 = vmatmul.mubr.bf16.gmra.mrb[0].mxu0 %v746
        %v1221 = vpop.f32.mrb[0].mxu0
        %v1222 = vadd.f32 %v1061, %v1221
        %v1223 = vpop.f32.mrb[0].mxu0
        %v1224 = vpop.f32.mrb[0].mxu0
        %v1225 = vadd.f32 %v1064, %v1224
        %v1226 = vpop.f32.mrb[0].mxu0
        %1227 = vmatprep.mubr.bf16.mxu0 0
        %1228 = vmatmul.mubr.bf16.gmra.mrb[0].mxu0 %v749
        %v1229 = vpop.f32.mrb[0].mxu0
        %v1230 = vadd.f32 %v1069, %v1229
        %v1231 = vpop.f32.mrb[0].mxu0
        %v1232 = vpop.f32.mrb[0].mxu0
        %v1233 = vadd.f32 %v1072, %v1232
        %v1234 = vpop.f32.mrb[0].mxu0
        %1235 = vmatprep.mubr.bf16.mxu0 0
        %1236 = vmatmul.mubr.bf16.gmra.mrb[0].mxu0 %v752
        %v1237 = vpop.f32.mrb[0].mxu0
        %v1238 = vadd.f32 %v1077, %v1237
        %v1239 = vpop.f32.mrb[0].mxu0
        %v1240 = vpop.f32.mrb[0].mxu0
        %v1241 = vadd.f32 %v1080, %v1240
        %v1242 = vpop.f32.mrb[0].mxu0
        %1243 = vmatprep.mubr.bf16.mxu0 0
        %1244 = vmatmul.mubr.bf16.gmra.mrb[0].mxu0 %v755
        %v1245 = vpop.f32.mrb[0].mxu0
        %v1246 = vadd.f32 %v1085, %v1245
        %v1247 = vpop.f32.mrb[0].mxu0
        %v1248 = vpop.f32.mrb[0].mxu0
        %v1249 = vadd.f32 %v1088, %v1248
        %v1250 = vpop.f32.mrb[0].mxu0
        %1251 = vmatprep.mubr.bf16.mxu0 0
        %1252 = vmatmul.mubr.bf16.gmra.mrb[0].mxu0 %v758
        %v1253 = vpop.f32.mrb[0].mxu0
        %v1254 = vadd.f32 %v1093, %v1253
        %v1255 = vpop.f32.mrb[0].mxu0
        %v1256 = vpop.f32.mrb[0].mxu0
        %v1257 = vadd.f32 %v1096, %v1256
        %v1258 = vpop.f32.mrb[0].mxu0
        %1259 = vmatprep.mubr.bf16.mxu0 0
        %1260 = vmatmul.mubr.bf16.gmra.mrb[0].mxu0 %v761
        %v1261 = vpop.f32.mrb[0].mxu0
        %v1262 = vadd.f32 %v1101, %v1261
        %v1263 = vpop.f32.mrb[0].mxu0
        %v1264 = vpop.f32.mrb[0].mxu0
        %v1265 = vadd.f32 %v1104, %v1264
        %v1266 = vpop.f32.mrb[0].mxu0
        %1267 = vmatprep.mubr.bf16.mxu0 0
        %1268 = vmatmul.mubr.bf16.gmra.mrb[0].mxu0 %v764
        %v1269 = vpop.f32.mrb[0].mxu0
        %v1270 = vadd.f32 %v1109, %v1269
        %v1271 = vpop.f32.mrb[0].mxu0
        %v1272 = vpop.f32.mrb[0].mxu0
        %v1273 = vadd.f32 %v1112, %v1272
        %v1274 = vpop.f32.mrb[0].mxu0
        %1275 = vmatprep.mubr.bf16.mxu0 0
        %1276 = vmatmul.mubr.bf16.gmra.mrb[0].mxu0 %v767
        %v1277 = vpop.f32.mrb[0].mxu0
        %v1278 = vadd.f32 %v1117, %v1277
        %v1279 = vpop.f32.mrb[0].mxu0
        %v1280 = vpop.f32.mrb[0].mxu0
        %v1281 = vadd.f32 %v1120, %v1280
        %v1282 = vpop.f32.mrb[0].mxu0
        %1283 = vmatprep.mubr.bf16.mxu0 0
        %1284 = vmatmul.mubr.bf16.gmra.mrb[0].mxu0 %v770
        %v1285 = vpop.f32.mrb[0].mxu0
        %v1286 = vadd.f32 %v1125, %v1285
        %v1287 = vpop.f32.mrb[0].mxu0
        %v1288 = vpop.f32.mrb[0].mxu0
        %v1289 = vadd.f32 %v1128, %v1288
        %v1290 = vpop.f32.mrb[0].mxu0
        %1291 = vdwg.mxu0
        %v1292 = vmax.f32 %v1166, 0.0
        %v1293 = vmax.f32 %v1169, 0.0
        %v1294 = vmax.f32 %v1174, 0.0
        %v1295 = vmax.f32 %v1177, 0.0
        %v1296 = vmax.f32 %v1182, 0.0
        %v1297 = vmax.f32 %v1185, 0.0
        %v1298 = vmax.f32 %v1190, 0.0
        %v1299 = vmax.f32 %v1193, 0.0
        %v1300 = vmax.f32 %v1198, 0.0
        %v1301 = vmax.f32 %v1201, 0.0
        %v1302 = vmax.f32 %v1206, 0.0
        %v1303 = vmax.f32 %v1209, 0.0
        %v1304 = vmax.f32 %v1214, 0.0
        %v1305 = vmax.f32 %v1217, 0.0
        %v1306 = vmax.f32 %v1222, 0.0
        %v1307 = vmax.f32 %v1225, 0.0
        %v1308 = vmax.f32 %v1230, 0.0
        %v1309 = vmax.f32 %v1233, 0.0
        %v1310 = vmax.f32 %v1238, 0.0
        %v1311 = vmax.f32 %v1241, 0.0
        %v1312 = vmax.f32 %v1246, 0.0
        %v1313 = vmax.f32 %v1249, 0.0
        %v1314 = vmax.f32 %v1254, 0.0
        %v1315 = vmax.f32 %v1257, 0.0
        %v1316 = vmax.f32 %v1262, 0.0
        %v1317 = vmax.f32 %v1265, 0.0
        %v1318 = vmax.f32 %v1270, 0.0
        %v1319 = vmax.f32 %v1273, 0.0
        %v1320 = vmax.f32 %v1278, 0.0
        %v1321 = vmax.f32 %v1281, 0.0
        %v1322 = vmax.f32 %v1286, 0.0
        %v1323 = vmax.f32 %v1289, 0.0
        %1324 = vst [vmem:[#allocation2] sm:$0x1] 0.0
        %v1357 = vrot.slane %v1292, 7
        %v1358 = vrot.slane %v1293, 7
        %v1359 = vsel %vm338, %v1357, %v1358
        %v1360 = vrot.slane %v1294, 7
        %v1361 = vsel %vm338, %v1358, %v1360
        %v1362 = vrot.slane %v1295, 7
        %v1363 = vsel %vm338, %v1360, %v1362
        %v1364 = vrot.slane %v1296, 7
        %v1365 = vsel %vm338, %v1362, %v1364
        %v1366 = vrot.slane %v1297, 7
        %v1367 = vsel %vm338, %v1364, %v1366
        %v1368 = vrot.slane %v1298, 7
        %v1369 = vsel %vm338, %v1366, %v1368
        %v1370 = vrot.slane %v1299, 7
        %v1371 = vsel %vm338, %v1368, %v1370
        %v1372 = vrot.slane %v1300, 7
        %v1373 = vsel %vm338, %v1370, %v1372
        %v1374 = vrot.slane %v1301, 7
        %v1375 = vsel %vm338, %v1372, %v1374
        %v1376 = vrot.slane %v1302, 7
        %v1377 = vsel %vm338, %v1374, %v1376
        %v1378 = vrot.slane %v1303, 7
        %v1379 = vsel %vm338, %v1376, %v1378
        %v1380 = vrot.slane %v1304, 7
        %v1381 = vsel %vm338, %v1378, %v1380
        %v1382 = vrot.slane %v1305, 7
        %v1383 = vsel %vm338, %v1380, %v1382
        %v1384 = vrot.slane %v1306, 7
        %v1385 = vsel %vm338, %v1382, %v1384
        %v1386 = vrot.slane %v1307, 7
        %v1387 = vsel %vm338, %v1384, %v1386
        %v1388 = vrot.slane %v1308, 7
        %v1389 = vsel %vm338, %v1386, %v1388
        %v1390 = vrot.slane %v1309, 7
        %v1391 = vsel %vm338, %v1388, %v1390
        %v1392 = vrot.slane %v1310, 7
        %v1393 = vsel %vm338, %v1390, %v1392
        %v1394 = vrot.slane %v1311, 7
        %v1395 = vsel %vm338, %v1392, %v1394
        %v1396 = vrot.slane %v1312, 7
        %v1397 = vsel %vm338, %v1394, %v1396
        %v1398 = vrot.slane %v1313, 7
        %v1399 = vsel %vm338, %v1396, %v1398
        %v1400 = vrot.slane %v1314, 7
        %v1401 = vsel %vm338, %v1398, %v1400
        %v1402 = vrot.slane %v1315, 7
        %v1403 = vsel %vm338, %v1400, %v1402
        %v1404 = vrot.slane %v1316, 7
        %v1405 = vsel %vm338, %v1402, %v1404
        %v1406 = vrot.slane %v1317, 7
        %v1407 = vsel %vm338, %v1404, %v1406
        %v1408 = vrot.slane %v1318, 7
        %v1409 = vsel %vm338, %v1406, %v1408
        %v1410 = vrot.slane %v1319, 7
        %v1411 = vsel %vm338, %v1408, %v1410
        %v1412 = vrot.slane %v1320, 7
        %v1413 = vsel %vm338, %v1410, %v1412
        %v1414 = vrot.slane %v1321, 7
        %v1415 = vsel %vm338, %v1412, %v1414
        %v1416 = vrot.slane %v1322, 7
        %v1417 = vsel %vm338, %v1414, %v1416
        %v1418 = vrot.slane %v1323, 7
        %v1419 = vsel %vm338, %v1416, %v1418
        %1452 = vst [vmem:[#allocation2] sm:$0xfe] %v1357
        %1453 = vst [vmem:[#allocation2 + $0x18] sm:$0xff] %v1359
        %1454 = vst [vmem:[#allocation2 + $0x30] sm:$0xff] %v1361
        %1455 = vst [vmem:[#allocation2 + $0x48] sm:$0xff] %v1363
        %1456 = vst [vmem:[#allocation2 + $0x60] sm:$0xff] %v1365
        %1457 = vst [vmem:[#allocation2 + $0x78] sm:$0xff] %v1367
        %1458 = vst [vmem:[#allocation2 + $0x90] sm:$0xff] %v1369
        %1459 = vst [vmem:[#allocation2 + $0xa8] sm:$0xff] %v1371
        %1460 = vst [vmem:[#allocation2 + $0xc0] sm:$0xff] %v1373
        %1461 = vst [vmem:[#allocation2 + $0xd8] sm:$0xff] %v1375
        %1462 = vst [vmem:[#allocation2 + $0xf0] sm:$0xff] %v1377
        %1463 = vst [vmem:[#allocation2 + $0x108] sm:$0xff] %v1379
        %1464 = vst [vmem:[#allocation2 + $0x120] sm:$0xff] %v1381
        %1465 = vst [vmem:[#allocation2 + $0x138] sm:$0xff] %v1383
        %1466 = vst [vmem:[#allocation2 + $0x150] sm:$0xff] %v1385
        %1467 = vst [vmem:[#allocation2 + $0x168] sm:$0xff] %v1387
        %1468 = vst [vmem:[#allocation2 + $0x180] sm:$0xff] %v1389
        %1469 = vst [vmem:[#allocation2 + $0x198] sm:$0xff] %v1391
        %1470 = vst [vmem:[#allocation2 + $0x1b0] sm:$0xff] %v1393
        %1471 = vst [vmem:[#allocation2 + $0x1c8] sm:$0xff] %v1395
        %1472 = vst [vmem:[#allocation2 + $0x1e0] sm:$0xff] %v1397
        %1473 = vst [vmem:[#allocation2 + $0x1f8] sm:$0xff] %v1399
        %1474 = vst [vmem:[#allocation2 + $0x210] sm:$0xff] %v1401
        %1475 = vst [vmem:[#allocation2 + $0x228] sm:$0xff] %v1403
        %1476 = vst [vmem:[#allocation2 + $0x240] sm:$0xff] %v1405
        %1477 = vst [vmem:[#allocation2 + $0x258] sm:$0xff] %v1407
        %1478 = vst [vmem:[#allocation2 + $0x270] sm:$0xff] %v1409
        %1479 = vst [vmem:[#allocation2 + $0x288] sm:$0xff] %v1411
        %1480 = vst [vmem:[#allocation2 + $0x2a0] sm:$0xff] %v1413
        %1481 = vst [vmem:[#allocation2 + $0x2b8] sm:$0xff] %v1415
        %1482 = vst [vmem:[#allocation2 + $0x2d0] sm:$0xff] %v1417
        %1483 = vst [vmem:[#allocation2 + $0x2e8] sm:$0xff] %v1419
        %1484 = vst [vmem:[#allocation2 + $0x8] sm:$0xff] %v1292
        %1485 = vst [vmem:[#allocation2 + $0x20] sm:$0xff] %v1293
        %1486 = vst [vmem:[#allocation2 + $0x38] sm:$0xff] %v1294
        %1487 = vst [vmem:[#allocation2 + $0x50] sm:$0xff] %v1295
        %1488 = vst [vmem:[#allocation2 + $0x68] sm:$0xff] %v1296
        %1489 = vst [vmem:[#allocation2 + $0x80] sm:$0xff] %v1297
        %1490 = vst [vmem:[#allocation2 + $0x98] sm:$0xff] %v1298
        %1491 = vst [vmem:[#allocation2 + $0xb0] sm:$0xff] %v1299
        %1492 = vst [vmem:[#allocation2 + $0xc8] sm:$0xff] %v1300
        %1493 = vst [vmem:[#allocation2 + $0xe0] sm:$0xff] %v1301
        %1494 = vst [vmem:[#allocation2 + $0xf8] sm:$0xff] %v1302
        %1495 = vst [vmem:[#allocation2 + $0x110] sm:$0xff] %v1303
        %1496 = vst [vmem:[#allocation2 + $0x128] sm:$0xff] %v1304
        %1497 = vst [vmem:[#allocation2 + $0x140] sm:$0xff] %v1305
        %1498 = vst [vmem:[#allocation2 + $0x158] sm:$0xff] %v1306
        %1499 = vst [vmem:[#allocation2 + $0x170] sm:$0xff] %v1307
        %1500 = vst [vmem:[#allocation2 + $0x188] sm:$0xff] %v1308
        %1501 = vst [vmem:[#allocation2 + $0x1a0] sm:$0xff] %v1309
        %1502 = vst [vmem:[#allocation2 + $0x1b8] sm:$0xff] %v1310
        %1503 = vst [vmem:[#allocation2 + $0x1d0] sm:$0xff] %v1311
        %1504 = vst [vmem:[#allocation2 + $0x1e8] sm:$0xff] %v1312
        %1505 = vst [vmem:[#allocation2 + $0x200] sm:$0xff] %v1313
        %1506 = vst [vmem:[#allocation2 + $0x218] sm:$0xff] %v1314
        %1507 = vst [vmem:[#allocation2 + $0x230] sm:$0xff] %v1315
        %1508 = vst [vmem:[#allocation2 + $0x248] sm:$0xff] %v1316
        %1509 = vst [vmem:[#allocation2 + $0x260] sm:$0xff] %v1317
        %1510 = vst [vmem:[#allocation2 + $0x278] sm:$0xff] %v1318
        %1511 = vst [vmem:[#allocation2 + $0x290] sm:$0xff] %v1319
        %1512 = vst [vmem:[#allocation2 + $0x2a8] sm:$0xff] %v1320
        %1513 = vst [vmem:[#allocation2 + $0x2c0] sm:$0xff] %v1321
        %1514 = vst [vmem:[#allocation2 + $0x2d8] sm:$0xff] %v1322
        %1515 = vst [vmem:[#allocation2 + $0x2f0] sm:$0xff] %v1323
        %v1516 = vrot.slane %v1292, 1
        %v1517 = vrot.slane %v1293, 1
        %v1518 = vsel %vm498, %v1516, %v1517
        %v1519 = vrot.slane %v1294, 1
        %v1520 = vsel %vm498, %v1517, %v1519
        %v1521 = vrot.slane %v1295, 1
        %v1522 = vsel %vm498, %v1519, %v1521
        %v1523 = vrot.slane %v1296, 1
        %v1524 = vsel %vm498, %v1521, %v1523
        %v1525 = vrot.slane %v1297, 1
        %v1526 = vsel %vm498, %v1523, %v1525
        %v1527 = vrot.slane %v1298, 1
        %v1528 = vsel %vm498, %v1525, %v1527
        %v1529 = vrot.slane %v1299, 1
        %v1530 = vsel %vm498, %v1527, %v1529
        %v1531 = vrot.slane %v1300, 1
        %v1532 = vsel %vm498, %v1529, %v1531
        %v1533 = vrot.slane %v1301, 1
        %v1534 = vsel %vm498, %v1531, %v1533
        %v1535 = vrot.slane %v1302, 1
        %v1536 = vsel %vm498, %v1533, %v1535
        %v1537 = vrot.slane %v1303, 1
        %v1538 = vsel %vm498, %v1535, %v1537
        %v1539 = vrot.slane %v1304, 1
        %v1540 = vsel %vm498, %v1537, %v1539
        %v1541 = vrot.slane %v1305, 1
        %v1542 = vsel %vm498, %v1539, %v1541
        %v1543 = vrot.slane %v1306, 1
        %v1544 = vsel %vm498, %v1541, %v1543
        %v1545 = vrot.slane %v1307, 1
        %v1546 = vsel %vm498, %v1543, %v1545
        %v1547 = vrot.slane %v1308, 1
        %v1548 = vsel %vm498, %v1545, %v1547
        %v1549 = vrot.slane %v1309, 1
        %v1550 = vsel %vm498, %v1547, %v1549
        %v1551 = vrot.slane %v1310, 1
        %v1552 = vsel %vm498, %v1549, %v1551
        %v1553 = vrot.slane %v1311, 1
        %v1554 = vsel %vm498, %v1551, %v1553
        %v1555 = vrot.slane %v1312, 1
        %v1556 = vsel %vm498, %v1553, %v1555
        %v1557 = vrot.slane %v1313, 1
        %v1558 = vsel %vm498, %v1555, %v1557
        %v1559 = vrot.slane %v1314, 1
        %v1560 = vsel %vm498, %v1557, %v1559
        %v1561 = vrot.slane %v1315, 1
        %v1562 = vsel %vm498, %v1559, %v1561
        %v1563 = vrot.slane %v1316, 1
        %v1564 = vsel %vm498, %v1561, %v1563
        %v1565 = vrot.slane %v1317, 1
        %v1566 = vsel %vm498, %v1563, %v1565
        %v1567 = vrot.slane %v1318, 1
        %v1568 = vsel %vm498, %v1565, %v1567
        %v1569 = vrot.slane %v1319, 1
        %v1570 = vsel %vm498, %v1567, %v1569
        %v1571 = vrot.slane %v1320, 1
        %v1572 = vsel %vm498, %v1569, %v1571
        %v1573 = vrot.slane %v1321, 1
        %v1574 = vsel %vm498, %v1571, %v1573
        %v1575 = vrot.slane %v1322, 1
        %v1576 = vsel %vm498, %v1573, %v1575
        %v1577 = vrot.slane %v1323, 1
        %v1578 = vsel %vm498, %v1575, %v1577
        %1611 = vst [vmem:[#allocation2 + $0x10] sm:$0xff] %v1518
        %1612 = vst [vmem:[#allocation2 + $0x28] sm:$0xff] %v1520
        %1613 = vst [vmem:[#allocation2 + $0x40] sm:$0xff] %v1522
        %1614 = vst [vmem:[#allocation2 + $0x58] sm:$0xff] %v1524
        %1615 = vst [vmem:[#allocation2 + $0x70] sm:$0xff] %v1526
        %1616 = vst [vmem:[#allocation2 + $0x88] sm:$0xff] %v1528
        %1617 = vst [vmem:[#allocation2 + $0xa0] sm:$0xff] %v1530
        %1618 = vst [vmem:[#allocation2 + $0xb8] sm:$0xff] %v1532
        %1619 = vst [vmem:[#allocation2 + $0xd0] sm:$0xff] %v1534
        %1620 = vst [vmem:[#allocation2 + $0xe8] sm:$0xff] %v1536
        %1621 = vst [vmem:[#allocation2 + $0x100] sm:$0xff] %v1538
        %1622 = vst [vmem:[#allocation2 + $0x118] sm:$0xff] %v1540
        %1623 = vst [vmem:[#allocation2 + $0x130] sm:$0xff] %v1542
        %1624 = vst [vmem:[#allocation2 + $0x148] sm:$0xff] %v1544
        %1625 = vst [vmem:[#allocation2 + $0x160] sm:$0xff] %v1546
        %1626 = vst [vmem:[#allocation2 + $0x178] sm:$0xff] %v1548
        %1627 = vst [vmem:[#allocation2 + $0x190] sm:$0xff] %v1550
        %1628 = vst [vmem:[#allocation2 + $0x1a8] sm:$0xff] %v1552
        %1629 = vst [vmem:[#allocation2 + $0x1c0] sm:$0xff] %v1554
        %1630 = vst [vmem:[#allocation2 + $0x1d8] sm:$0xff] %v1556
        %1631 = vst [vmem:[#allocation2 + $0x1f0] sm:$0xff] %v1558
        %1632 = vst [vmem:[#allocation2 + $0x208] sm:$0xff] %v1560
        %1633 = vst [vmem:[#allocation2 + $0x220] sm:$0xff] %v1562
        %1634 = vst [vmem:[#allocation2 + $0x238] sm:$0xff] %v1564
        %1635 = vst [vmem:[#allocation2 + $0x250] sm:$0xff] %v1566
        %1636 = vst [vmem:[#allocation2 + $0x268] sm:$0xff] %v1568
        %1637 = vst [vmem:[#allocation2 + $0x280] sm:$0xff] %v1570
        %1638 = vst [vmem:[#allocation2 + $0x298] sm:$0xff] %v1572
        %1639 = vst [vmem:[#allocation2 + $0x2b0] sm:$0xff] %v1574
        %1640 = vst [vmem:[#allocation2 + $0x2c8] sm:$0xff] %v1576
        %1641 = vst [vmem:[#allocation2 + $0x2e0] sm:$0xff] %v1578
        %1642 = vst [vmem:[#allocation2 + $0x2f8] sm:$0x7f] %v1577
        %1643 = vst [vmem:[#allocation2 + $0x2ff] sm:$0x1] 0.0
        %v1644 = vld [vmem:[#allocation2] sm:$0xff]
        %v1645 = vld [vmem:[#allocation2 + $0x8] sm:$0xff]
        %v1646 = vld [vmem:[#allocation2 + $0x10] sm:$0xff]
        %v1647 = vld [vmem:[#allocation2 + $0x18] sm:$0xff]
        %v1648 = vld [vmem:[#allocation2 + $0x20] sm:$0xff]
        %v1649 = vld [vmem:[#allocation2 + $0x28] sm:$0xff]
        %v1650 = vld [vmem:[#allocation2 + $0x30] sm:$0xff]
        %v1651 = vld [vmem:[#allocation2 + $0x38] sm:$0xff]
        %v1652 = vld [vmem:[#allocation2 + $0x40] sm:$0xff]
        %v1653 = vld [vmem:[#allocation2 + $0x48] sm:$0xff]
        %v1654 = vld [vmem:[#allocation2 + $0x50] sm:$0xff]
        %v1655 = vld [vmem:[#allocation2 + $0x58] sm:$0xff]
        %v1656 = vld [vmem:[#allocation2 + $0x60] sm:$0xff]
        %v1657 = vld [vmem:[#allocation2 + $0x68] sm:$0xff]
        %v1658 = vld [vmem:[#allocation2 + $0x70] sm:$0xff]
        %v1659 = vld [vmem:[#allocation2 + $0x78] sm:$0xff]
        %v1660 = vld [vmem:[#allocation2 + $0x80] sm:$0xff]
        %v1661 = vld [vmem:[#allocation2 + $0x88] sm:$0xff]
        %v1662 = vld [vmem:[#allocation2 + $0x90] sm:$0xff]
        %v1663 = vld [vmem:[#allocation2 + $0x98] sm:$0xff]
        %v1664 = vld [vmem:[#allocation2 + $0xa0] sm:$0xff]
        %v1665 = vld [vmem:[#allocation2 + $0xa8] sm:$0xff]
        %v1666 = vld [vmem:[#allocation2 + $0xb0] sm:$0xff]
        %v1667 = vld [vmem:[#allocation2 + $0xb8] sm:$0xff]
        %v1668 = vld [vmem:[#allocation2 + $0xc0] sm:$0xff]
        %v1669 = vld [vmem:[#allocation2 + $0xc8] sm:$0xff]
        %v1670 = vld [vmem:[#allocation2 + $0xd0] sm:$0xff]
        %v1671 = vld [vmem:[#allocation2 + $0xd8] sm:$0xff]
        %v1672 = vld [vmem:[#allocation2 + $0xe0] sm:$0xff]
        %v1673 = vld [vmem:[#allocation2 + $0xe8] sm:$0xff]
        %v1674 = vld [vmem:[#allocation2 + $0xf0] sm:$0xff]
        %v1675 = vld [vmem:[#allocation2 + $0xf8] sm:$0xff]
        %v1676 = vld [vmem:[#allocation2 + $0x100] sm:$0xff]
        %v1677 = vld [vmem:[#allocation2 + $0x108] sm:$0xff]
        %v1678 = vld [vmem:[#allocation2 + $0x110] sm:$0xff]
        %v1679 = vld [vmem:[#allocation2 + $0x118] sm:$0xff]
        %v1680 = vld [vmem:[#allocation2 + $0x120] sm:$0xff]
        %v1681 = vld [vmem:[#allocation2 + $0x128] sm:$0xff]
        %v1682 = vld [vmem:[#allocation2 + $0x130] sm:$0xff]
        %v1683 = vld [vmem:[#allocation2 + $0x138] sm:$0xff]
        %v1684 = vld [vmem:[#allocation2 + $0x140] sm:$0xff]
        %v1685 = vld [vmem:[#allocation2 + $0x148] sm:$0xff]
        %v1686 = vld [vmem:[#allocation2 + $0x150] sm:$0xff]
        %v1687 = vld [vmem:[#allocation2 + $0x158] sm:$0xff]
        %v1688 = vld [vmem:[#allocation2 + $0x160] sm:$0xff]
        %v1689 = vld [vmem:[#allocation2 + $0x168] sm:$0xff]
        %v1690 = vld [vmem:[#allocation2 + $0x170] sm:$0xff]
        %v1691 = vld [vmem:[#allocation2 + $0x178] sm:$0xff]
        %v1692 = vld [vmem:[#allocation2 + $0x180] sm:$0xff]
        %v1693 = vld [vmem:[#allocation2 + $0x188] sm:$0xff]
        %v1694 = vld [vmem:[#allocation2 + $0x190] sm:$0xff]
        %v1695 = vld [vmem:[#allocation2 + $0x198] sm:$0xff]
        %v1696 = vld [vmem:[#allocation2 + $0x1a0] sm:$0xff]
        %v1697 = vld [vmem:[#allocation2 + $0x1a8] sm:$0xff]
        %v1698 = vld [vmem:[#allocation2 + $0x1b0] sm:$0xff]
        %v1699 = vld [vmem:[#allocation2 + $0x1b8] sm:$0xff]
        %v1700 = vld [vmem:[#allocation2 + $0x1c0] sm:$0xff]
        %v1701 = vld [vmem:[#allocation2 + $0x1c8] sm:$0xff]
        %v1702 = vld [vmem:[#allocation2 + $0x1d0] sm:$0xff]
        %v1703 = vld [vmem:[#allocation2 + $0x1d8] sm:$0xff]
        %v1704 = vld [vmem:[#allocation2 + $0x1e0] sm:$0xff]
        %v1705 = vld [vmem:[#allocation2 + $0x1e8] sm:$0xff]
        %v1706 = vld [vmem:[#allocation2 + $0x1f0] sm:$0xff]
        %v1707 = vld [vmem:[#allocation2 + $0x1f8] sm:$0xff]
        %v1708 = vld [vmem:[#allocation2 + $0x200] sm:$0xff]
        %v1709 = vld [vmem:[#allocation2 + $0x208] sm:$0xff]
        %v1710 = vld [vmem:[#allocation2 + $0x210] sm:$0xff]
        %v1711 = vld [vmem:[#allocation2 + $0x218] sm:$0xff]
        %v1712 = vld [vmem:[#allocation2 + $0x220] sm:$0xff]
        %v1713 = vld [vmem:[#allocation2 + $0x228] sm:$0xff]
        %v1714 = vld [vmem:[#allocation2 + $0x230] sm:$0xff]
        %v1715 = vld [vmem:[#allocation2 + $0x238] sm:$0xff]
        %v1716 = vld [vmem:[#allocation2 + $0x240] sm:$0xff]
        %v1717 = vld [vmem:[#allocation2 + $0x248] sm:$0xff]
        %v1718 = vld [vmem:[#allocation2 + $0x250] sm:$0xff]
        %v1719 = vld [vmem:[#allocation2 + $0x258] sm:$0xff]
        %v1720 = vld [vmem:[#allocation2 + $0x260] sm:$0xff]
        %v1721 = vld [vmem:[#allocation2 + $0x268] sm:$0xff]
        %v1722 = vld [vmem:[#allocation2 + $0x270] sm:$0xff]
        %v1723 = vld [vmem:[#allocation2 + $0x278] sm:$0xff]
        %v1724 = vld [vmem:[#allocation2 + $0x280] sm:$0xff]
        %v1725 = vld [vmem:[#allocation2 + $0x288] sm:$0xff]
        %v1726 = vld [vmem:[#allocation2 + $0x290] sm:$0xff]
        %v1727 = vld [vmem:[#allocation2 + $0x298] sm:$0xff]
        %v1728 = vld [vmem:[#allocation2 + $0x2a0] sm:$0xff]
        %v1729 = vld [vmem:[#allocation2 + $0x2a8] sm:$0xff]
        %v1730 = vld [vmem:[#allocation2 + $0x2b0] sm:$0xff]
        %v1731 = vld [vmem:[#allocation2 + $0x2b8] sm:$0xff]
        %v1732 = vld [vmem:[#allocation2 + $0x2c0] sm:$0xff]
        %v1733 = vld [vmem:[#allocation2 + $0x2c8] sm:$0xff]
        %v1734 = vld [vmem:[#allocation2 + $0x2d0] sm:$0xff]
        %v1735 = vld [vmem:[#allocation2 + $0x2d8] sm:$0xff]
        %v1736 = vld [vmem:[#allocation2 + $0x2e0] sm:$0xff]
        %v1737 = vld [vmem:[#allocation2 + $0x2e8] sm:$0xff]
        %v1738 = vld [vmem:[#allocation2 + $0x2f0] sm:$0xff]
        %v1739 = vld [vmem:[#allocation2 + $0x2f8] sm:$0xff]
        %v1740 = vpack.c.bf16 %v1647, %v1644
        %v1741 = vpack.c.bf16 %v1648, %v1645
        %v1742 = vpack.c.bf16 %v1649, %v1646
        %v1743 = vpack.c.bf16 %v1653, %v1650
        %v1744 = vpack.c.bf16 %v1654, %v1651
        %v1745 = vpack.c.bf16 %v1655, %v1652
        %v1746 = vpack.c.bf16 %v1659, %v1656
        %v1747 = vpack.c.bf16 %v1660, %v1657
        %v1748 = vpack.c.bf16 %v1661, %v1658
        %v1749 = vpack.c.bf16 %v1665, %v1662
        %v1750 = vpack.c.bf16 %v1666, %v1663
        %v1751 = vpack.c.bf16 %v1667, %v1664
        %v1752 = vpack.c.bf16 %v1671, %v1668
        %v1753 = vpack.c.bf16 %v1672, %v1669
        %v1754 = vpack.c.bf16 %v1673, %v1670
        %v1755 = vpack.c.bf16 %v1677, %v1674
        %v1756 = vpack.c.bf16 %v1678, %v1675
        %v1757 = vpack.c.bf16 %v1679, %v1676
        %v1758 = vpack.c.bf16 %v1683, %v1680
        %v1759 = vpack.c.bf16 %v1684, %v1681
        %v1760 = vpack.c.bf16 %v1685, %v1682
        %v1761 = vpack.c.bf16 %v1689, %v1686
        %v1762 = vpack.c.bf16 %v1690, %v1687
        %v1763 = vpack.c.bf16 %v1691, %v1688
        %v1764 = vpack.c.bf16 %v1695, %v1692
        %v1765 = vpack.c.bf16 %v1696, %v1693
        %v1766 = vpack.c.bf16 %v1697, %v1694
        %v1767 = vpack.c.bf16 %v1701, %v1698
        %v1768 = vpack.c.bf16 %v1702, %v1699
        %v1769 = vpack.c.bf16 %v1703, %v1700
        %v1770 = vpack.c.bf16 %v1707, %v1704
        %v1771 = vpack.c.bf16 %v1708, %v1705
        %v1772 = vpack.c.bf16 %v1709, %v1706
        %v1773 = vpack.c.bf16 %v1713, %v1710
        %v1774 = vpack.c.bf16 %v1714, %v1711
        %v1775 = vpack.c.bf16 %v1715, %v1712
        %v1776 = vpack.c.bf16 %v1719, %v1716
        %v1777 = vpack.c.bf16 %v1720, %v1717
        %v1778 = vpack.c.bf16 %v1721, %v1718
        %v1779 = vpack.c.bf16 %v1725, %v1722
        %v1780 = vpack.c.bf16 %v1726, %v1723
        %v1781 = vpack.c.bf16 %v1727, %v1724
        %v1782 = vpack.c.bf16 %v1731, %v1728
        %v1783 = vpack.c.bf16 %v1732, %v1729
        %v1784 = vpack.c.bf16 %v1733, %v1730
        %v1785 = vpack.c.bf16 %v1737, %v1734
        %v1786 = vpack.c.bf16 %v1738, %v1735
        %v1787 = vpack.c.bf16 %v1739, %v1736
        %v1788 = vld [vmem:[#allocation8] sm:$0xf]
        %v1789 = vld [vmem:[#allocation8 + $0x4] sm:$0xf]
        %v1790 = vld [vmem:[#allocation8 + $0x8] sm:$0xf]
        %v1791 = vld [vmem:[#allocation8 + $0xc] sm:$0xf]
        %v1792 = vld [vmem:[#allocation8 + $0x10] sm:$0xf]
        %v1793 = vld [vmem:[#allocation8 + $0x14] sm:$0xf]
        %v1794 = vld [vmem:[#allocation8 + $0x18] sm:$0xf]
        %v1795 = vld [vmem:[#allocation8 + $0x1c] sm:$0xf]
        %v1796 = vld [vmem:[#allocation8 + $0x20] sm:$0xf]
        %v1797 = vld [vmem:[#allocation8 + $0x24] sm:$0xf]
        %v1798 = vld [vmem:[#allocation8 + $0x28] sm:$0xf]
        %v1799 = vld [vmem:[#allocation8 + $0x2c] sm:$0xf]
        %v1800 = vld [vmem:[#allocation8 + $0x30] sm:$0xf]
        %v1801 = vld [vmem:[#allocation8 + $0x34] sm:$0xf]
        %v1802 = vld [vmem:[#allocation8 + $0x38] sm:$0xf]
        %v1803 = vld [vmem:[#allocation8 + $0x3c] sm:$0xf]
        %v1804 = vld [vmem:[#allocation8 + $0x40] sm:$0xf]
        %v1805 = vld [vmem:[#allocation8 + $0x44] sm:$0xf]
        %v1806 = vld [vmem:[#allocation8 + $0x48] sm:$0xf]
        %v1807 = vld [vmem:[#allocation8 + $0x4c] sm:$0xf]
        %v1808 = vld [vmem:[#allocation8 + $0x50] sm:$0xf]
        %v1809 = vld [vmem:[#allocation8 + $0x54] sm:$0xf]
        %v1810 = vld [vmem:[#allocation8 + $0x58] sm:$0xf]
        %v1811 = vld [vmem:[#allocation8 + $0x5c] sm:$0xf]
        %v1812 = vld [vmem:[#allocation8 + $0x60] sm:$0xf]
        %v1813 = vld [vmem:[#allocation8 + $0x64] sm:$0xf]
        %v1814 = vld [vmem:[#allocation8 + $0x68] sm:$0xf]
        %v1815 = vld [vmem:[#allocation8 + $0x6c] sm:$0xf]
        %v1816 = vld [vmem:[#allocation8 + $0x70] sm:$0xf]
        %v1817 = vld [vmem:[#allocation8 + $0x74] sm:$0xf]
        %v1818 = vld [vmem:[#allocation8 + $0x78] sm:$0xf]
        %v1819 = vld [vmem:[#allocation8 + $0x7c] sm:$0xf]
        %v1820 = vld [vmem:[#allocation8 + $0x80] sm:$0xf]
        %v1821 = vld [vmem:[#allocation8 + $0x84] sm:$0xf]
        %v1822 = vld [vmem:[#allocation8 + $0x88] sm:$0xf]
        %v1823 = vld [vmem:[#allocation8 + $0x8c] sm:$0xf]
        %v1824 = vld [vmem:[#allocation8 + $0x90] sm:$0xf]
        %v1825 = vld [vmem:[#allocation8 + $0x94] sm:$0xf]
        %v1826 = vld [vmem:[#allocation8 + $0x98] sm:$0xf]
        %v1827 = vld [vmem:[#allocation8 + $0x9c] sm:$0xf]
        %v1828 = vld [vmem:[#allocation8 + $0xa0] sm:$0xf]
        %v1829 = vld [vmem:[#allocation8 + $0xa4] sm:$0xf]
        %v1830 = vld [vmem:[#allocation8 + $0xa8] sm:$0xf]
        %v1831 = vld [vmem:[#allocation8 + $0xac] sm:$0xf]
        %v1832 = vld [vmem:[#allocation8 + $0xb0] sm:$0xf]
        %v1833 = vld [vmem:[#allocation8 + $0xb4] sm:$0xf]
        %v1834 = vld [vmem:[#allocation8 + $0xb8] sm:$0xf]
        %v1835 = vld [vmem:[#allocation8 + $0xbc] sm:$0xf]
        %v1836 = vld [vmem:[%s4] sm:$0x1]
        %v1838 = vlaneseq
        %v1839 = vshrl.u32 %v1838, 7
        %v1840 = vsub.s32 0, %v1839
        %v1841 = vrot.slane %v1836, %v1840
        %v1891 = vunpack.c.l.b16 %v1788
        %v1892 = vunpack.c.l.b16 %v1789
        %v1893 = vunpack.c.l.b16 %v1790
        %v1894 = vunpack.c.l.b16 %v1791
        %v1895 = vunpack.c.l.b16 %v1792
        %v1896 = vunpack.c.l.b16 %v1793
        %v1897 = vunpack.c.l.b16 %v1794
        %v1898 = vunpack.c.l.b16 %v1795
        %v1899 = vunpack.c.l.b16 %v1796
        %v1900 = vunpack.c.l.b16 %v1797
        %v1901 = vunpack.c.l.b16 %v1798
        %v1902 = vunpack.c.l.b16 %v1799
        %v1903 = vunpack.c.l.b16 %v1800
        %v1904 = vunpack.c.l.b16 %v1801
        %v1905 = vunpack.c.l.b16 %v1802
        %v1906 = vunpack.c.l.b16 %v1803
        %v1907 = vunpack.c.l.b16 %v1804
        %v1908 = vunpack.c.l.b16 %v1805
        %v1909 = vunpack.c.l.b16 %v1806
        %v1910 = vunpack.c.l.b16 %v1807
        %v1911 = vunpack.c.l.b16 %v1808
        %v1912 = vunpack.c.l.b16 %v1809
        %v1913 = vunpack.c.l.b16 %v1810
        %v1914 = vunpack.c.l.b16 %v1811
        %v1915 = vunpack.c.l.b16 %v1812
        %v1916 = vunpack.c.l.b16 %v1813
        %v1917 = vunpack.c.l.b16 %v1814
        %v1918 = vunpack.c.l.b16 %v1815
        %v1919 = vunpack.c.l.b16 %v1816
        %v1920 = vunpack.c.l.b16 %v1817
        %v1921 = vunpack.c.l.b16 %v1818
        %v1922 = vunpack.c.l.b16 %v1819
        %v1923 = vunpack.c.l.b16 %v1820
        %v1924 = vunpack.c.l.b16 %v1821
        %v1925 = vunpack.c.l.b16 %v1822
        %v1926 = vunpack.c.l.b16 %v1823
        %v1927 = vunpack.c.l.b16 %v1824
        %v1928 = vunpack.c.l.b16 %v1825
        %v1929 = vunpack.c.l.b16 %v1826
        %v1930 = vunpack.c.l.b16 %v1827
        %v1931 = vunpack.c.l.b16 %v1828
        %v1932 = vunpack.c.l.b16 %v1829
        %v1933 = vunpack.c.l.b16 %v1830
        %v1934 = vunpack.c.l.b16 %v1831
        %v1935 = vunpack.c.l.b16 %v1832
        %v1936 = vunpack.c.l.b16 %v1833
        %v1937 = vunpack.c.l.b16 %v1834
        %v1938 = vunpack.c.l.b16 %v1835
        %v1939 = vpack.c.b16 %v1892, %v1891
        %v1940 = vpack.c.b16 %v1894, %v1893
        %v1941 = vpack.c.b16 %v1896, %v1895
        %v1942 = vpack.c.b16 %v1898, %v1897
        %v1943 = vpack.c.b16 %v1900, %v1899
        %v1944 = vpack.c.b16 %v1902, %v1901
        %v1945 = vpack.c.b16 %v1904, %v1903
        %v1946 = vpack.c.b16 %v1906, %v1905
        %v1947 = vpack.c.b16 %v1908, %v1907
        %v1948 = vpack.c.b16 %v1910, %v1909
        %v1949 = vpack.c.b16 %v1912, %v1911
        %v1950 = vpack.c.b16 %v1914, %v1913
        %v1951 = vpack.c.b16 %v1916, %v1915
        %v1952 = vpack.c.b16 %v1918, %v1917
        %v1953 = vpack.c.b16 %v1920, %v1919
        %v1954 = vpack.c.b16 %v1922, %v1921
        %v1955 = vpack.c.b16 %v1924, %v1923
        %v1956 = vpack.c.b16 %v1926, %v1925
        %v1957 = vpack.c.b16 %v1928, %v1927
        %v1958 = vpack.c.b16 %v1930, %v1929
        %v1959 = vpack.c.b16 %v1932, %v1931
        %v1960 = vpack.c.b16 %v1934, %v1933
        %v1961 = vpack.c.b16 %v1936, %v1935
        %v1962 = vpack.c.b16 %v1938, %v1937
        %1987 = vmatprep.subr.bf16.mxu0 0
        %1988 = vmatpush1.bf16.msra.mxu0 %v1939
        %1989 = vmatprep.subr.bf16.mxu0 0
        %1990 = vmatpush1.bf16.msra.mxu0 %v1940
        %1991 = vmatprep.subr.bf16.mxu0 0
        %1992 = vmatpush1.bf16.msra.mxu0 %v1941
        %1993 = vmatprep.subr.bf16.mxu0 0
        %1994 = vmatpush1.bf16.msra.mxu0 %v1942
        %1995 = vmatprep.subr.bf16.mxu0 0
        %1996 = vmatpush1.bf16.msra.mxu0 %v1943
        %1997 = vmatprep.subr.bf16.mxu0 0
        %1998 = vmatpush1.bf16.msra.mxu0 %v1944
        %1999 = vmatprep.subr.bf16.mxu0 0
        %2000 = vmatpush1.bf16.msra.mxu0 %v1945
        %2001 = vmatprep.subr.bf16.mxu0 0
        %2002 = vmatpush1.bf16.msra.mxu0 %v1946
        %2003 = vmatprep.subr.bf16.mxu0 0
        %2004 = vmatpush1.bf16.msra.mxu0 %v1947
        %2005 = vmatprep.subr.bf16.mxu0 0
        %2006 = vmatpush1.bf16.msra.mxu0 %v1948
        %2007 = vmatprep.subr.bf16.mxu0 0
        %2008 = vmatpush1.bf16.msra.mxu0 %v1949
        %2009 = vmatprep.subr.bf16.mxu0 0
        %2010 = vmatpush1.bf16.msra.mxu0 %v1950
        %2011 = vmatprep.subr.bf16.mxu0 0
        %2012 = vmatpush1.bf16.msra.mxu0 %v1951
        %2013 = vmatprep.subr.bf16.mxu0 0
        %2014 = vmatpush1.bf16.msra.mxu0 %v1952
        %2015 = vmatprep.subr.bf16.mxu0 0
        %2016 = vmatpush1.bf16.msra.mxu0 %v1953
        %2017 = vmatprep.subr.bf16.mxu0 0
        %2018 = vmatpush1.bf16.msra.mxu0 %v1954
        %2019 = vmatprep.mubr.bf16.mxu0 %v1741
        %2020 = vmatmul.mubr.bf16.gmra.mrb[0].mxu0 %v1740
        %v2021 = vpop.f32.mrb[0].mxu0
        %v2022 = vadd.f32 %v1841, %v2021
        %v2023 = vpop.f32.mrb[0].mxu0
        %v2024 = vpop.f32.mrb[0].mxu0
        %v2025 = vadd.f32 %v1841, %v2024
        %v2026 = vpop.f32.mrb[0].mxu0
        %2027 = vmatprep.mubr.bf16.mxu0 %v1744
        %2028 = vmatmul.mubr.bf16.gmra.mrb[0].mxu0 %v1743
        %v2029 = vpop.f32.mrb[0].mxu0
        %v2030 = vadd.f32 %v1841, %v2029
        %v2031 = vpop.f32.mrb[0].mxu0
        %v2032 = vpop.f32.mrb[0].mxu0
        %v2033 = vadd.f32 %v1841, %v2032
        %v2034 = vpop.f32.mrb[0].mxu0
        %2035 = vmatprep.mubr.bf16.mxu0 %v1747
        %2036 = vmatmul.mubr.bf16.gmra.mrb[0].mxu0 %v1746
        %v2037 = vpop.f32.mrb[0].mxu0
        %v2038 = vadd.f32 %v1841, %v2037
        %v2039 = vpop.f32.mrb[0].mxu0
        %v2040 = vpop.f32.mrb[0].mxu0
        %v2041 = vadd.f32 %v1841, %v2040
        %v2042 = vpop.f32.mrb[0].mxu0
        %2043 = vmatprep.mubr.bf16.mxu0 %v1750
        %2044 = vmatmul.mubr.bf16.gmra.mrb[0].mxu0 %v1749
        %v2045 = vpop.f32.mrb[0].mxu0
        %v2046 = vadd.f32 %v1841, %v2045
        %v2047 = vpop.f32.mrb[0].mxu0
        %v2048 = vpop.f32.mrb[0].mxu0
        %v2049 = vadd.f32 %v1841, %v2048
        %v2050 = vpop.f32.mrb[0].mxu0
        %2051 = vmatprep.mubr.bf16.mxu0 %v1753
        %2052 = vmatmul.mubr.bf16.gmra.mrb[0].mxu0 %v1752
        %v2053 = vpop.f32.mrb[0].mxu0
        %v2054 = vadd.f32 %v1841, %v2053
        %v2055 = vpop.f32.mrb[0].mxu0
        %v2056 = vpop.f32.mrb[0].mxu0
        %v2057 = vadd.f32 %v1841, %v2056
        %v2058 = vpop.f32.mrb[0].mxu0
        %2059 = vmatprep.mubr.bf16.mxu0 %v1756
        %2060 = vmatmul.mubr.bf16.gmra.mrb[0].mxu0 %v1755
        %v2061 = vpop.f32.mrb[0].mxu0
        %v2062 = vadd.f32 %v1841, %v2061
        %v2063 = vpop.f32.mrb[0].mxu0
        %v2064 = vpop.f32.mrb[0].mxu0
        %v2065 = vadd.f32 %v1841, %v2064
        %v2066 = vpop.f32.mrb[0].mxu0
        %2067 = vmatprep.mubr.bf16.mxu0 %v1759
        %2068 = vmatmul.mubr.bf16.gmra.mrb[0].mxu0 %v1758
        %v2069 = vpop.f32.mrb[0].mxu0
        %v2070 = vadd.f32 %v1841, %v2069
        %v2071 = vpop.f32.mrb[0].mxu0
        %v2072 = vpop.f32.mrb[0].mxu0
        %v2073 = vadd.f32 %v1841, %v2072
        %v2074 = vpop.f32.mrb[0].mxu0
        %2075 = vmatprep.mubr.bf16.mxu0 %v1762
        %2076 = vmatmul.mubr.bf16.gmra.mrb[0].mxu0 %v1761
        %v2077 = vpop.f32.mrb[0].mxu0
        %v2078 = vadd.f32 %v1841, %v2077
        %v2079 = vpop.f32.mrb[0].mxu0
        %v2080 = vpop.f32.mrb[0].mxu0
        %v2081 = vadd.f32 %v1841, %v2080
        %v2082 = vpop.f32.mrb[0].mxu0
        %2083 = vmatprep.mubr.bf16.mxu0 %v1765
        %2084 = vmatmul.mubr.bf16.gmra.mrb[0].mxu0 %v1764
        %v2085 = vpop.f32.mrb[0].mxu0
        %v2086 = vadd.f32 %v1841, %v2085
        %v2087 = vpop.f32.mrb[0].mxu0
        %v2088 = vpop.f32.mrb[0].mxu0
        %v2089 = vadd.f32 %v1841, %v2088
        %v2090 = vpop.f32.mrb[0].mxu0
        %2091 = vmatprep.mubr.bf16.mxu0 %v1768
        %2092 = vmatmul.mubr.bf16.gmra.mrb[0].mxu0 %v1767
        %v2093 = vpop.f32.mrb[0].mxu0
        %v2094 = vadd.f32 %v1841, %v2093
        %v2095 = vpop.f32.mrb[0].mxu0
        %v2096 = vpop.f32.mrb[0].mxu0
        %v2097 = vadd.f32 %v1841, %v2096
        %v2098 = vpop.f32.mrb[0].mxu0
        %2099 = vmatprep.mubr.bf16.mxu0 %v1771
        %2100 = vmatmul.mubr.bf16.gmra.mrb[0].mxu0 %v1770
        %v2101 = vpop.f32.mrb[0].mxu0
        %v2102 = vadd.f32 %v1841, %v2101
        %v2103 = vpop.f32.mrb[0].mxu0
        %v2104 = vpop.f32.mrb[0].mxu0
        %v2105 = vadd.f32 %v1841, %v2104
        %v2106 = vpop.f32.mrb[0].mxu0
        %2107 = vmatprep.mubr.bf16.mxu0 %v1774
        %2108 = vmatmul.mubr.bf16.gmra.mrb[0].mxu0 %v1773
        %v2109 = vpop.f32.mrb[0].mxu0
        %v2110 = vadd.f32 %v1841, %v2109
        %v2111 = vpop.f32.mrb[0].mxu0
        %v2112 = vpop.f32.mrb[0].mxu0
        %v2113 = vadd.f32 %v1841, %v2112
        %v2114 = vpop.f32.mrb[0].mxu0
        %2115 = vmatprep.mubr.bf16.mxu0 %v1777
        %2116 = vmatmul.mubr.bf16.gmra.mrb[0].mxu0 %v1776
        %v2117 = vpop.f32.mrb[0].mxu0
        %v2118 = vadd.f32 %v1841, %v2117
        %v2119 = vpop.f32.mrb[0].mxu0
        %v2120 = vpop.f32.mrb[0].mxu0
        %v2121 = vadd.f32 %v1841, %v2120
        %v2122 = vpop.f32.mrb[0].mxu0
        %2123 = vmatprep.mubr.bf16.mxu0 %v1780
        %2124 = vmatmul.mubr.bf16.gmra.mrb[0].mxu0 %v1779
        %v2125 = vpop.f32.mrb[0].mxu0
        %v2126 = vadd.f32 %v1841, %v2125
        %v2127 = vpop.f32.mrb[0].mxu0
        %v2128 = vpop.f32.mrb[0].mxu0
        %v2129 = vadd.f32 %v1841, %v2128
        %v2130 = vpop.f32.mrb[0].mxu0
        %2131 = vmatprep.mubr.bf16.mxu0 %v1783
        %2132 = vmatmul.mubr.bf16.gmra.mrb[0].mxu0 %v1782
        %v2133 = vpop.f32.mrb[0].mxu0
        %v2134 = vadd.f32 %v1841, %v2133
        %v2135 = vpop.f32.mrb[0].mxu0
        %v2136 = vpop.f32.mrb[0].mxu0
        %v2137 = vadd.f32 %v1841, %v2136
        %v2138 = vpop.f32.mrb[0].mxu0
        %2139 = vmatprep.mubr.bf16.mxu0 %v1786
        %2140 = vmatmul.mubr.bf16.gmra.mrb[0].mxu0 %v1785
        %v2141 = vpop.f32.mrb[0].mxu0
        %v2142 = vadd.f32 %v1841, %v2141
        %v2143 = vpop.f32.mrb[0].mxu0
        %v2144 = vpop.f32.mrb[0].mxu0
        %v2145 = vadd.f32 %v1841, %v2144
        %v2146 = vpop.f32.mrb[0].mxu0
        %2147 = vdwg.mxu0
        %2148 = vmatprep.subr.bf16.mxu0 0
        %2149 = vmatpush1.bf16.msra.mxu0 %v1955
        %2150 = vmatprep.subr.bf16.mxu0 0
        %2151 = vmatpush1.bf16.msra.mxu0 %v1956
        %2152 = vmatprep.subr.bf16.mxu0 0
        %2153 = vmatpush1.bf16.msra.mxu0 %v1957
        %2154 = vmatprep.subr.bf16.mxu0 0
        %2155 = vmatpush1.bf16.msra.mxu0 %v1958
        %2156 = vmatprep.subr.bf16.mxu0 0
        %2157 = vmatpush1.bf16.msra.mxu0 %v1959
        %2158 = vmatprep.subr.bf16.mxu0 0
        %2159 = vmatpush1.bf16.msra.mxu0 %v1960
        %2160 = vmatprep.subr.bf16.mxu0 0
        %2161 = vmatpush1.bf16.msra.mxu0 %v1961
        %2162 = vmatprep.subr.bf16.mxu0 0
        %2163 = vmatpush1.bf16.msra.mxu0 %v1962
        %2164 = vmatprep.subr.bf16.mxu0 0
        %2165 = vmatpush1.bf16.msra.mxu0 0
        %2166 = vmatprep.subr.bf16.mxu0 0
        %2167 = vmatpush1.bf16.msra.mxu0 0
        %2168 = vmatprep.subr.bf16.mxu0 0
        %2169 = vmatpush1.bf16.msra.mxu0 0
        %2170 = vmatprep.subr.bf16.mxu0 0
        %2171 = vmatpush1.bf16.msra.mxu0 0
        %2172 = vmatprep.subr.bf16.mxu0 0
        %2173 = vmatpush1.bf16.msra.mxu0 0
        %2174 = vmatprep.subr.bf16.mxu0 0
        %2175 = vmatpush1.bf16.msra.mxu0 0
        %2176 = vmatprep.subr.bf16.mxu0 0
        %2177 = vmatpush1.bf16.msra.mxu0 0
        %2178 = vmatprep.subr.bf16.mxu0 0
        %2179 = vmatpush1.bf16.msra.mxu0 0
        %2180 = vmatprep.mubr.bf16.mxu0 0
        %2181 = vmatmul.mubr.bf16.gmra.mrb[0].mxu0 %v1742
        %v2182 = vpop.f32.mrb[0].mxu0
        %v2183 = vadd.f32 %v2022, %v2182
        %v2184 = vpop.f32.mrb[0].mxu0
        %v2185 = vpop.f32.mrb[0].mxu0
        %v2186 = vadd.f32 %v2025, %v2185
        %v2187 = vpop.f32.mrb[0].mxu0
        %2188 = vmatprep.mubr.bf16.mxu0 0
        %2189 = vmatmul.mubr.bf16.gmra.mrb[0].mxu0 %v1745
        %v2190 = vpop.f32.mrb[0].mxu0
        %v2191 = vadd.f32 %v2030, %v2190
        %v2192 = vpop.f32.mrb[0].mxu0
        %v2193 = vpop.f32.mrb[0].mxu0
        %v2194 = vadd.f32 %v2033, %v2193
        %v2195 = vpop.f32.mrb[0].mxu0
        %2196 = vmatprep.mubr.bf16.mxu0 0
        %2197 = vmatmul.mubr.bf16.gmra.mrb[0].mxu0 %v1748
        %v2198 = vpop.f32.mrb[0].mxu0
        %v2199 = vadd.f32 %v2038, %v2198
        %v2200 = vpop.f32.mrb[0].mxu0
        %v2201 = vpop.f32.mrb[0].mxu0
        %v2202 = vadd.f32 %v2041, %v2201
        %v2203 = vpop.f32.mrb[0].mxu0
        %2204 = vmatprep.mubr.bf16.mxu0 0
        %2205 = vmatmul.mubr.bf16.gmra.mrb[0].mxu0 %v1751
        %v2206 = vpop.f32.mrb[0].mxu0
        %v2207 = vadd.f32 %v2046, %v2206
        %v2208 = vpop.f32.mrb[0].mxu0
        %v2209 = vpop.f32.mrb[0].mxu0
        %v2210 = vadd.f32 %v2049, %v2209
        %v2211 = vpop.f32.mrb[0].mxu0
        %2212 = vmatprep.mubr.bf16.mxu0 0
        %2213 = vmatmul.mubr.bf16.gmra.mrb[0].mxu0 %v1754
        %v2214 = vpop.f32.mrb[0].mxu0
        %v2215 = vadd.f32 %v2054, %v2214
        %v2216 = vpop.f32.mrb[0].mxu0
        %v2217 = vpop.f32.mrb[0].mxu0
        %v2218 = vadd.f32 %v2057, %v2217
        %v2219 = vpop.f32.mrb[0].mxu0
        %2220 = vmatprep.mubr.bf16.mxu0 0
        %2221 = vmatmul.mubr.bf16.gmra.mrb[0].mxu0 %v1757
        %v2222 = vpop.f32.mrb[0].mxu0
        %v2223 = vadd.f32 %v2062, %v2222
        %v2224 = vpop.f32.mrb[0].mxu0
        %v2225 = vpop.f32.mrb[0].mxu0
        %v2226 = vadd.f32 %v2065, %v2225
        %v2227 = vpop.f32.mrb[0].mxu0
        %2228 = vmatprep.mubr.bf16.mxu0 0
        %2229 = vmatmul.mubr.bf16.gmra.mrb[0].mxu0 %v1760
        %v2230 = vpop.f32.mrb[0].mxu0
        %v2231 = vadd.f32 %v2070, %v2230
        %v2232 = vpop.f32.mrb[0].mxu0
        %v2233 = vpop.f32.mrb[0].mxu0
        %v2234 = vadd.f32 %v2073, %v2233
        %v2235 = vpop.f32.mrb[0].mxu0
        %2236 = vmatprep.mubr.bf16.mxu0 0
        %2237 = vmatmul.mubr.bf16.gmra.mrb[0].mxu0 %v1763
        %v2238 = vpop.f32.mrb[0].mxu0
        %v2239 = vadd.f32 %v2078, %v2238
        %v2240 = vpop.f32.mrb[0].mxu0
        %v2241 = vpop.f32.mrb[0].mxu0
        %v2242 = vadd.f32 %v2081, %v2241
        %v2243 = vpop.f32.mrb[0].mxu0
        %2244 = vmatprep.mubr.bf16.mxu0 0
        %2245 = vmatmul.mubr.bf16.gmra.mrb[0].mxu0 %v1766
        %v2246 = vpop.f32.mrb[0].mxu0
        %v2247 = vadd.f32 %v2086, %v2246
        %v2248 = vpop.f32.mrb[0].mxu0
        %v2249 = vpop.f32.mrb[0].mxu0
        %v2250 = vadd.f32 %v2089, %v2249
        %v2251 = vpop.f32.mrb[0].mxu0
        %2252 = vmatprep.mubr.bf16.mxu0 0
        %2253 = vmatmul.mubr.bf16.gmra.mrb[0].mxu0 %v1769
        %v2254 = vpop.f32.mrb[0].mxu0
        %v2255 = vadd.f32 %v2094, %v2254
        %v2256 = vpop.f32.mrb[0].mxu0
        %v2257 = vpop.f32.mrb[0].mxu0
        %v2258 = vadd.f32 %v2097, %v2257
        %v2259 = vpop.f32.mrb[0].mxu0
        %2260 = vmatprep.mubr.bf16.mxu0 0
        %2261 = vmatmul.mubr.bf16.gmra.mrb[0].mxu0 %v1772
        %v2262 = vpop.f32.mrb[0].mxu0
        %v2263 = vadd.f32 %v2102, %v2262
        %v2264 = vpop.f32.mrb[0].mxu0
        %v2265 = vpop.f32.mrb[0].mxu0
        %v2266 = vadd.f32 %v2105, %v2265
        %v2267 = vpop.f32.mrb[0].mxu0
        %2268 = vmatprep.mubr.bf16.mxu0 0
        %2269 = vmatmul.mubr.bf16.gmra.mrb[0].mxu0 %v1775
        %v2270 = vpop.f32.mrb[0].mxu0
        %v2271 = vadd.f32 %v2110, %v2270
        %v2272 = vpop.f32.mrb[0].mxu0
        %v2273 = vpop.f32.mrb[0].mxu0
        %v2274 = vadd.f32 %v2113, %v2273
        %v2275 = vpop.f32.mrb[0].mxu0
        %2276 = vmatprep.mubr.bf16.mxu0 0
        %2277 = vmatmul.mubr.bf16.gmra.mrb[0].mxu0 %v1778
        %v2278 = vpop.f32.mrb[0].mxu0
        %v2279 = vadd.f32 %v2118, %v2278
        %v2280 = vpop.f32.mrb[0].mxu0
        %v2281 = vpop.f32.mrb[0].mxu0
        %v2282 = vadd.f32 %v2121, %v2281
        %v2283 = vpop.f32.mrb[0].mxu0
        %2284 = vmatprep.mubr.bf16.mxu0 0
        %2285 = vmatmul.mubr.bf16.gmra.mrb[0].mxu0 %v1781
        %v2286 = vpop.f32.mrb[0].mxu0
        %v2287 = vadd.f32 %v2126, %v2286
        %v2288 = vpop.f32.mrb[0].mxu0
        %v2289 = vpop.f32.mrb[0].mxu0
        %v2290 = vadd.f32 %v2129, %v2289
        %v2291 = vpop.f32.mrb[0].mxu0
        %2292 = vmatprep.mubr.bf16.mxu0 0
        %2293 = vmatmul.mubr.bf16.gmra.mrb[0].mxu0 %v1784
        %v2294 = vpop.f32.mrb[0].mxu0
        %v2295 = vadd.f32 %v2134, %v2294
        %v2296 = vpop.f32.mrb[0].mxu0
        %v2297 = vpop.f32.mrb[0].mxu0
        %v2298 = vadd.f32 %v2137, %v2297
        %v2299 = vpop.f32.mrb[0].mxu0
        %2300 = vmatprep.mubr.bf16.mxu0 0
        %2301 = vmatmul.mubr.bf16.gmra.mrb[0].mxu0 %v1787
        %v2302 = vpop.f32.mrb[0].mxu0
        %v2303 = vadd.f32 %v2142, %v2302
        %v2304 = vpop.f32.mrb[0].mxu0
        %v2305 = vpop.f32.mrb[0].mxu0
        %v2306 = vadd.f32 %v2145, %v2305
        %v2307 = vpop.f32.mrb[0].mxu0
        %2308 = vdwg.mxu0
        %v2309 = vadd.f32 %v2183, %v273
        %v2310 = vadd.f32 %v2186, %v274
        %v2311 = vadd.f32 %v2191, %v275
        %v2312 = vadd.f32 %v2194, %v276
        %v2313 = vadd.f32 %v2199, %v277
        %v2314 = vadd.f32 %v2202, %v278
        %v2315 = vadd.f32 %v2207, %v279
        %v2316 = vadd.f32 %v2210, %v280
        %v2317 = vadd.f32 %v2215, %v281
        %v2318 = vadd.f32 %v2218, %v282
        %v2319 = vadd.f32 %v2223, %v283
        %v2320 = vadd.f32 %v2226, %v284
        %v2321 = vadd.f32 %v2231, %v285
        %v2322 = vadd.f32 %v2234, %v286
        %v2323 = vadd.f32 %v2239, %v287
        %v2324 = vadd.f32 %v2242, %v288
        %v2325 = vadd.f32 %v2247, %v289
        %v2326 = vadd.f32 %v2250, %v290
        %v2327 = vadd.f32 %v2255, %v291
        %v2328 = vadd.f32 %v2258, %v292
        %v2329 = vadd.f32 %v2263, %v293
        %v2330 = vadd.f32 %v2266, %v294
        %v2331 = vadd.f32 %v2271, %v295
        %v2332 = vadd.f32 %v2274, %v296
        %v2333 = vadd.f32 %v2279, %v297
        %v2334 = vadd.f32 %v2282, %v298
        %v2335 = vadd.f32 %v2287, %v299
        %v2336 = vadd.f32 %v2290, %v300
        %v2337 = vadd.f32 %v2295, %v301
        %v2338 = vadd.f32 %v2298, %v302
        %v2339 = vadd.f32 %v2303, %v303
        %v2340 = vadd.f32 %v2306, %v304
        %v2341 = vmax.f32 %v2309, 0.0
        %v2342 = vmax.f32 %v2310, 0.0
        %v2343 = vmax.f32 %v2311, 0.0
        %v2344 = vmax.f32 %v2312, 0.0
        %v2345 = vmax.f32 %v2313, 0.0
        %v2346 = vmax.f32 %v2314, 0.0
        %v2347 = vmax.f32 %v2315, 0.0
        %v2348 = vmax.f32 %v2316, 0.0
        %v2349 = vmax.f32 %v2317, 0.0
        %v2350 = vmax.f32 %v2318, 0.0
        %v2351 = vmax.f32 %v2319, 0.0
        %v2352 = vmax.f32 %v2320, 0.0
        %v2353 = vmax.f32 %v2321, 0.0
        %v2354 = vmax.f32 %v2322, 0.0
        %v2355 = vmax.f32 %v2323, 0.0
        %v2356 = vmax.f32 %v2324, 0.0
        %v2357 = vmax.f32 %v2325, 0.0
        %v2358 = vmax.f32 %v2326, 0.0
        %v2359 = vmax.f32 %v2327, 0.0
        %v2360 = vmax.f32 %v2328, 0.0
        %v2361 = vmax.f32 %v2329, 0.0
        %v2362 = vmax.f32 %v2330, 0.0
        %v2363 = vmax.f32 %v2331, 0.0
        %v2364 = vmax.f32 %v2332, 0.0
        %v2365 = vmax.f32 %v2333, 0.0
        %v2366 = vmax.f32 %v2334, 0.0
        %v2367 = vmax.f32 %v2335, 0.0
        %v2368 = vmax.f32 %v2336, 0.0
        %v2369 = vmax.f32 %v2337, 0.0
        %v2370 = vmax.f32 %v2338, 0.0
        %v2371 = vmax.f32 %v2339, 0.0
        %v2372 = vmax.f32 %v2340, 0.0
        %2373 = vst [vmem:[%s271] sm:$0xff] %v2341
        %2374 = vst [vmem:[%s271 + $0x8] sm:$0xff] %v2342
        %2375 = vst [vmem:[%s271 + $0x10] sm:$0xff] %v2343
        %2376 = vst [vmem:[%s271 + $0x18] sm:$0xff] %v2344
        %2377 = vst [vmem:[%s271 + $0x20] sm:$0xff] %v2345
        %2378 = vst [vmem:[%s271 + $0x28] sm:$0xff] %v2346
        %2379 = vst [vmem:[%s271 + $0x30] sm:$0xff] %v2347
        %2380 = vst [vmem:[%s271 + $0x38] sm:$0xff] %v2348
        %2381 = vst [vmem:[%s271 + $0x40] sm:$0xff] %v2349
        %2382 = vst [vmem:[%s271 + $0x48] sm:$0xff] %v2350
        %2383 = vst [vmem:[%s271 + $0x50] sm:$0xff] %v2351
        %2384 = vst [vmem:[%s271 + $0x58] sm:$0xff] %v2352
        %2385 = vst [vmem:[%s271 + $0x60] sm:$0xff] %v2353
        %2386 = vst [vmem:[%s271 + $0x68] sm:$0xff] %v2354
        %2387 = vst [vmem:[%s271 + $0x70] sm:$0xff] %v2355
        %2388 = vst [vmem:[%s271 + $0x78] sm:$0xff] %v2356
        %2389 = vst [vmem:[%s271 + $0x80] sm:$0xff] %v2357
        %2390 = vst [vmem:[%s271 + $0x88] sm:$0xff] %v2358
        %2391 = vst [vmem:[%s271 + $0x90] sm:$0xff] %v2359
        %2392 = vst [vmem:[%s271 + $0x98] sm:$0xff] %v2360
        %2393 = vst [vmem:[%s271 + $0xa0] sm:$0xff] %v2361
        %2394 = vst [vmem:[%s271 + $0xa8] sm:$0xff] %v2362
        %2395 = vst [vmem:[%s271 + $0xb0] sm:$0xff] %v2363
        %2396 = vst [vmem:[%s271 + $0xb8] sm:$0xff] %v2364
        %2397 = vst [vmem:[%s271 + $0xc0] sm:$0xff] %v2365
        %2398 = vst [vmem:[%s271 + $0xc8] sm:$0xff] %v2366
        %2399 = vst [vmem:[%s271 + $0xd0] sm:$0xff] %v2367
        %2400 = vst [vmem:[%s271 + $0xd8] sm:$0xff] %v2368
        %2401 = vst [vmem:[%s271 + $0xe0] sm:$0xff] %v2369
        %2402 = vst [vmem:[%s271 + $0xe8] sm:$0xff] %v2370
        %2403 = vst [vmem:[%s271 + $0xf0] sm:$0xff] %v2371
        %2404 = vst [vmem:[%s271 + $0xf8] sm:$0xff] %v2372
        %s2405 = sand.u32 %s141, 1
        %s2406 = scalar_lea.sflag [#allocation5], %s2405
        %s2407 = sand.u32 %s141, 1
        %s2408 = smul.addr %s2407, 256
        %s2409 = scalar_lea.vmem [#allocation9], %s2408
        // Predicated region
        $region53: #{tpu_custom_call.1} parent=39 // pred_check
          %p2410 = pneg %p151
        $region54: #{tpu_custom_call.1} parent=39 // pred_check_branch
          %2412 = sbr.rel (%p2410) target = $region56
        $region55: #{tpu_custom_call.1} parent=39 // pred_region
          %s2414 = ssub.s32 4096, 4096
          %2415 = vsyncadd %s2406, %s2414
          %s2416 = smul.addr %s23, 32
          %s2417 = smul.addr %s2416, 128
          %s2418 = scalar_lea.hbm %s5, %s2417
          %s2419 = sshll.u32 %s2409, 4
          %s2420 = int_to_ptr.vmem [resolvable:$true] %s2419
          %2425 = dma.vmem_to_hbm [thread:$0]  %s2420, 4096, %s2418, %s2406, 128, 128, 8
        $region56: #{tpu_custom_call.1} parent=39 // pred_fallthru
          _
      $region40: #{tpu_custom_call.1} parent=5 // pred_fallthru
        _
      %p2426 = scmp.le.s32.totalorder 2, %s18
      // Predicated region
      $region57: #{tpu_custom_call.1} parent=5 // pred_check
        %p2427 = pneg %p2426
      $region58: #{tpu_custom_call.1} parent=5 // pred_check_branch
        %2429 = sbr.rel (%p2427) target = $region60
      $region59: #{tpu_custom_call.1} parent=5 // pred_region
        %s2430 = ssub.s32 %s18, 2
        // Predicated region
        $region61: #{tpu_custom_call.1} parent=59 // pred_check
          %p2431 = pneg %p157
        $region62: #{tpu_custom_call.1} parent=59 // pred_check_branch
          %2433 = sbr.rel (%p2431) target = $region64
        $region63: #{tpu_custom_call.1} parent=59 // pred_region
          %s2434 = sand.u32 %s142, 1
          %s2435 = scalar_lea.sflag [#allocation5], %s2434
          %s2436 = sand.u32 %s142, 1
          %s2437 = smul.addr %s2436, 256
          %s2438 = scalar_lea.vmem [#allocation9], %s2437
          %2439 = dma.done %s2435, 4096
        $region64: #{tpu_custom_call.1} parent=59 // pred_fallthru
          _
      $region60: #{tpu_custom_call.1} parent=5 // pred_fallthru
        _
    $region6: #{tpu_custom_call.1} parent=1 // loop_footer
      %s22 = sadd.s32 1, %s18
    $region7: #{tpu_custom_call.1} parent=1 // loop_footer_branch
      %17 = sbr.rel target = $region3
    $region8: #{tpu_custom_call.1} parent=1 // loop_exit
      _
    %2440 = vsyncpa [#allocation4], 1
    %s2441 = scalar_lea.sflag [#allocation4], 1
    %2442 = vsyncpa %s2441, 1
    %2443 = vsyncpa [#allocation7], 1
    %2444 = vsyncpa [#allocation5], 1
    %s2445 = scalar_lea.sflag [#allocation5], 1
    %2446 = vsyncpa %s2445, 1

</llo_original>
